<compile_context>
chip_gen: v5e
topology: v5e:2x2
jax: 0.10.0
libtpu: 0.0.40
codegen_flags: <defaults>
</compile_context>

<pallas_src>
import jax
import jax.numpy as jnp
from jax import lax
from jax.experimental import pallas as pl
from jax.experimental.pallas import tpu as pltpu

D_MODEL = 32
NHEAD = 4
HEAD_DIM = D_MODEL // NHEAD
EPS_ATTN = 1e-6   # LinearAttention eps
EPS_LN = 1e-5     # torch.nn.LayerNorm default eps


def _elu_feature_map(x):
    # elu(x) + 1  (alpha = 1)
    return jnp.where(x > 0, x + 1.0, jnp.exp(jnp.minimum(x, 0.0)))


def _token_layer_norm(t, mavg, gamma, beta):
    # Per-token LayerNorm in the packed layout: mean/var via a block-diagonal
    # averaging matmul (MXU) instead of cross-lane reductions (XLU).
    mu = jnp.dot(t, mavg, preferred_element_type=jnp.float32)
    xc = t - mu
    var = jnp.dot(xc * xc, mavg, preferred_element_type=jnp.float32)
    return xc * lax.rsqrt(var + EPS_LN) * gamma + beta


def loftr_encoder_kernel(x_ref, src_ref, f2_ref,
                         wk_ref, wv_ref,
                         wxcat_ref, wm_ref, w1m_ref, w2_ref,
                         et_ref, hmask_ref, mavg_ref,
                         g1_ref, b1_ref, g2_ref, b2_ref,
                         o_ref):
    nb, Lp, CP = x_ref.shape          # x is token-packed: P tokens per 128-lane row
    S = src_ref.shape[1]
    C = wk_ref.shape[0]
    P = CP // C
    Rp = nb * Lp

    xp = x_ref[...].reshape(Rp, CP)
    src2 = src_ref[...].reshape(nb * S, C)
    f22 = f2_ref[...].reshape(nb * S, C)

    # ---- source/value path (kept C-wide; it only feeds the per-batch (C,C) KV
    # statistic and the (C,) K-sum). ------------------------------------------
    # TODO(synk): when source is feat2 at the call site, wk/wv could be fused
    # into one (C, 2C) weight to halve this projection work.
    k = jnp.dot(src2, wk_ref[...], preferred_element_type=jnp.float32)
    v = jnp.dot(f22, wv_ref[...], preferred_element_type=jnp.float32)
    kf = _elu_feature_map(k).reshape(nb, S, C)
    v3 = v.reshape(nb, S, C)

    # KV = sum_s K_s^T V_s  (batched contraction over S, no explicit .T).
    kv = jnp.einsum('nsc,nsd->ncd', kf, v3,
                    preferred_element_type=jnp.float32)               # (nb, C, C)
    ksum = jnp.sum(kf, axis=1)                                        # (nb, C)

    # Replicate KV / K-sum into the packed layout without lane-splitting reshapes:
    #   kv_blk[n, a, b] = KV[n, a % C, b % C] * (a//HEAD_DIM == b//HEAD_DIM)
    # (lane replication via E^T matmul, sublane replication via concat, then the
    #  static head/token block-diagonal mask).
    et = et_ref[...]                                                  # (C, CP)
    kv_lane = jnp.dot(kv.reshape(nb * C, C), et,
                      preferred_element_type=jnp.float32).reshape(nb, C, CP)
    kv_rep = jnp.concatenate([kv_lane] * P, axis=1)                   # (nb, CP, CP)
    kv_blk = kv_rep * hmask_ref[...]
    ksum_rep = jnp.dot(ksum, et, preferred_element_type=jnp.float32)  # (nb, CP)

    # ---- query/output path, P-token-packed --------------------------------
    # Single fused matmul over x: columns [0, CP) -> q projection, columns
    # [CP, 3*CP) -> the x half of the MLP's first layer (both block-diagonal).
    xproj = jnp.dot(xp, wxcat_ref[...], preferred_element_type=jnp.float32)
    qf = _elu_feature_map(xproj[:, :CP])                              # (Rp, CP)
    hid_x = xproj[:, CP:]                                             # (Rp, 2*CP)

    qf3 = qf.reshape(nb, Lp, CP)
    num = jnp.einsum('nrc,ncd->nrd', qf3, kv_blk,
                     preferred_element_type=jnp.float32).reshape(Rp, CP)
    qk2 = (qf3 * ksum_rep[:, None, :]).reshape(Rp, CP)
    z_den = jnp.dot(qk2, hmask_ref[...], preferred_element_type=jnp.float32)

    # Exact divide keeps the tight fp32 tolerance (review: approx reciprocal is
    # borderline at 1e-4); swap to pl.reciprocal(..., approx=True) if allowed.
    msg = num / (z_den + EPS_ATTN)

    # merge + norm1
    msg = jnp.dot(msg, wm_ref[...], preferred_element_type=jnp.float32)
    msg = _token_layer_norm(msg, mavg_ref[...], g1_ref[...], b1_ref[...])

    # mlp(cat([x, message])) with no concatenate anywhere.
    hid = jnp.maximum(
        hid_x + jnp.dot(msg, w1m_ref[...], preferred_element_type=jnp.float32),
        0.0)                                                          # (Rp, 2*CP)
    msg = jnp.dot(hid, w2_ref[...], preferred_element_type=jnp.float32)
    msg = _token_layer_norm(msg, mavg_ref[...], g2_ref[...], b2_ref[...])

    # residual; 128-lane-dense output store.
    o_ref[...] = (xp + msg).reshape(nb, Lp, CP)


def _pick_pack(L, C):
    """Largest token-packing factor P (<=128/C) that divides L."""
    p = max(1, 128 // C)
    while p > 1 and L % p != 0:
        p //= 2
    return p


def _default_min_steps():
    # v7x has 2 TensorCores per chip -> keep >=2 grid steps so the (parallel)
    # batch axis can shard across them. v5e/v6e are single-TC: maximize nb.
    try:
        kind = jax.devices()[0].device_kind.lower()
        return 2 if "v7" in kind else 1
    except Exception:  # pragma: no cover
        return 1


def _pick_nb(N, bytes_per_batch, min_steps=1):
    """Batch elements per grid step. Per-step overhead is ~0.35us and per-step
    token bytes are tiny, so maximize nb; VMEM stays far below the limit on all
    generations (cap per-step token bytes at ~8 MiB for safety)."""
    cap = max(1, (8 << 20) // max(bytes_per_batch, 1))
    nb = max(1, min(N, cap))
    if min_steps > 1 and N >= min_steps:
        nb = max(1, min(nb, N // min_steps))
    while N % nb:
        nb -= 1
    return nb


def loftr_encoder_layer(x, source, feat2, params, nb=None, min_steps=None):
    """x: (N, L, C); source, feat2: (N, S, C). Returns (N, L, C)."""
    N, L, C = x.shape
    S = source.shape[1]
    (wq, wk, wv, wm, w1, w2, g1, b1, g2, b2) = params

    P = _pick_pack(L, C)
    CP = P * C
    Lp = L // P
    eyeP = jnp.eye(P, dtype=jnp.float32)
    kron = lambda w: jnp.kron(eyeP, w)

    # Split the first MLP weight (torch cat([x, message]): first C rows act on x).
    w1x = w1[:C]     # (C, 2C)
    w1m = w1[C:]     # (C, 2C)

    # Block-diagonal token-packed weights (built once, outside the kernel).
    wxcat = jnp.concatenate([kron(wq), kron(w1x)], axis=1)    # (CP, 3*CP)
    wm_blk = kron(wm)                                         # (CP, CP)
    w1m_blk = kron(w1m)                                       # (CP, 2*CP)
    w2_blk = kron(w2)                                         # (2*CP, CP)

    # Static helper matrices (hoisted out of the per-step kernel body).
    lane = jnp.arange(CP)
    et = (lane[None, :] % C == jnp.arange(C)[:, None]).astype(jnp.float32)      # (C, CP)
    hmask = (lane[:, None] // HEAD_DIM == lane[None, :] // HEAD_DIM).astype(jnp.float32)
    mavg = (lane[:, None] // C == lane[None, :] // C).astype(jnp.float32) / C   # (CP, CP)

    g1t = jnp.tile(g1, (1, P)); b1t = jnp.tile(b1, (1, P))
    g2t = jnp.tile(g2, (1, P)); b2t = jnp.tile(b2, (1, P))

    # Token packing of x is a free, contiguous reshape in HBM.
    x_p = x.reshape(N, Lp, CP)

    if min_steps is None:
        min_steps = _default_min_steps()
    if nb is None:
        bytes_per_batch = (Lp * CP + 2 * S * C) * 4
        nb = _pick_nb(N, bytes_per_batch, min_steps=min_steps)
    assert N % nb == 0, f"nb={nb} must divide N={N}"
    grid = (N // nb,)

    tok = lambda shp: pl.BlockSpec((nb,) + shp, lambda n: (n, 0, 0))
    cst = lambda shp: pl.BlockSpec(shp, lambda n: (0,) * len(shp))

    grid_spec = pltpu.PrefetchScalarGridSpec(
        num_scalar_prefetch=0,
        grid=grid,
        in_specs=[
            tok((Lp, CP)),            # x (token-packed)
            tok((S, C)),              # source
            tok((S, C)),              # feat2
            cst((C, C)),              # wk
            cst((C, C)),              # wv
            cst((CP, 3 * CP)),        # fused [q | mlp-x] block-diag weight
            cst((CP, CP)),            # merge block-diag weight
            cst((CP, 2 * CP)),        # mlp layer-1 (message half, block-diag)
            cst((2 * CP, CP)),        # mlp layer-2 (block-diag)
            cst((C, CP)),             # lane replication matrix E^T
            cst((CP, CP)),            # head/token block-diagonal mask
            cst((CP, CP)),            # per-token averaging matrix (LayerNorm)
            cst((1, CP)), cst((1, CP)),   # norm1 gamma/beta (lane-tiled)
            cst((1, CP)), cst((1, CP)),   # norm2 gamma/beta (lane-tiled)
        ],
        out_specs=pl.BlockSpec((nb, Lp, CP), lambda n: (n, 0, 0)),
    )

    out = pl.pallas_call(
        loftr_encoder_kernel,
        out_shape=jax.ShapeDtypeStruct((N, Lp, CP), jnp.float32),
        grid_spec=grid_spec,
        compiler_params=pltpu.CompilerParams(
            dimension_semantics=("parallel",)),
    )(x_p, source, feat2, wk, wv, wxcat, wm_blk, w1m_blk, w2_blk,
      et, hmask, mavg, g1t, b1t, g2t, b2t)

    return out.reshape(N, L, C)


def reference_forward(x, source, feat2, params):
    """Pure-JAX reference of the PyTorch forward (attention='linear', no masks)."""
    (wq, wk, wv, wm, w1, w2, g1, b1, g2, b2) = params
    N, L, C = x.shape
    S = source.shape[1]
    H, D = NHEAD, HEAD_DIM

    q = (x @ wq).reshape(N, L, H, D)
    k = (source @ wk).reshape(N, S, H, D)
    v = (feat2 @ wv).reshape(N, S, H, D)

    Q = _elu_feature_map(q)
    K = _elu_feature_map(k)
    vals = v / S
    KV = jnp.einsum("nshd,nshv->nhdv", K, vals)
    Z = 1.0 / (jnp.einsum("nlhd,nhd->nlh", Q, K.sum(axis=1)) + EPS_ATTN)
    msg = jnp.einsum("nlhd,nhdv->nlhv", Q, KV) * Z[..., None] * S
    msg = msg.reshape(N, L, C) @ wm

    def ln(t, g, b):
        mu = t.mean(-1, keepdims=True)
        var = ((t - mu) ** 2).mean(-1, keepdims=True)
        return (t - mu) / jnp.sqrt(var + EPS_LN) * g + b

    msg = ln(msg, g1[0], b1[0])
    cat = jnp.concatenate([x, msg], axis=-1)
    msg = jnp.maximum(cat @ w1, 0.0) @ w2
    msg = ln(msg, g2[0], b2[0])
    return x + msg


if __name__ == "__main__":
    N, L, S, C = 2, 8, 8, D_MODEL

    key = jax.random.PRNGKey(0)
    keys = jax.random.split(key, 13)

    x = jax.random.normal(keys[0], (N, L, C), jnp.float32)
    source = jax.random.normal(keys[1], (N, S, C), jnp.float32)
    feat2 = jax.random.normal(keys[2], (N, S, C), jnp.float32)

    scale = 0.1
    wq = scale * jax.random.normal(keys[3], (C, C), jnp.float32)
    wk = scale * jax.random.normal(keys[4], (C, C), jnp.float32)
    wv = scale * jax.random.normal(keys[5], (C, C), jnp.float32)
    wm = scale * jax.random.normal(keys[6], (C, C), jnp.float32)
    w1 = scale * jax.random.normal(keys[7], (2 * C, 2 * C), jnp.float32)
    w2 = scale * jax.random.normal(keys[8], (2 * C, C), jnp.float32)
    g1 = 1.0 + 0.1 * jax.random.normal(keys[9], (1, C), jnp.float32)
    b1 = 0.1 * jax.random.normal(keys[10], (1, C), jnp.float32)
    g2 = 1.0 + 0.1 * jax.random.normal(keys[11], (1, C), jnp.float32)
    b2 = 0.1 * jax.random.normal(keys[12], (1, C), jnp.float32)

    params = (wq, wk, wv, wm, w1, w2, g1, b1, g2, b2)

    out = loftr_encoder_layer(x, source, feat2, params)
    out = jax.block_until_ready(out)

    ref = reference_forward(x, source, feat2, params)
    assert out.shape == (N, L, C)
    assert jnp.allclose(out, ref, atol=2e-4, rtol=2e-4), (
        f"max abs err = {jnp.max(jnp.abs(out - ref))}")

    print("KERNEL_OK")
</pallas_src>

<mosaic_0001>
module attributes {stable_mosaic.version = 11 : i64} {
  func.func @loftr_encoder_kernel(%arg0: i32, %arg1: memref<2x2x128xf32, #tpu.memory_space<vmem>>, %arg2: memref<2x8x32xf32, #tpu.memory_space<vmem>>, %arg3: memref<2x8x32xf32, #tpu.memory_space<vmem>>, %arg4: memref<32x32xf32, #tpu.memory_space<vmem>>, %arg5: memref<32x32xf32, #tpu.memory_space<vmem>>, %arg6: memref<128x384xf32, #tpu.memory_space<vmem>>, %arg7: memref<128x128xf32, #tpu.memory_space<vmem>>, %arg8: memref<128x256xf32, #tpu.memory_space<vmem>>, %arg9: memref<256x128xf32, #tpu.memory_space<vmem>>, %arg10: memref<32x128xf32, #tpu.memory_space<vmem>>, %arg11: memref<128x128xf32, #tpu.memory_space<vmem>>, %arg12: memref<128x128xf32, #tpu.memory_space<vmem>>, %arg13: memref<1x128xf32, #tpu.memory_space<vmem>>, %arg14: memref<1x128xf32, #tpu.memory_space<vmem>>, %arg15: memref<1x128xf32, #tpu.memory_space<vmem>>, %arg16: memref<1x128xf32, #tpu.memory_space<vmem>>, %arg17: memref<2x2x128xf32, #tpu.memory_space<vmem>>) attributes {dimension_semantics = [#tpu.dimension_semantics<parallel>], iteration_bounds = array<i64: 1>, scalar_prefetch = 0 : i64, scratch_operands = 0 : i64, tpu.core_type = #tpu.core_type<tc>, window_params = [{transform_indices = @transform_0, window_bounds = array<i64: 2, 2, 128>}, {transform_indices = @transform_1, window_bounds = array<i64: 2, 8, 32>}, {transform_indices = @transform_2, window_bounds = array<i64: 2, 8, 32>}, {pipeline_mode = #tpu.pipeline_mode<synchronous>, transform_indices = @transform_3, window_bounds = array<i64: 32, 32>}, {pipeline_mode = #tpu.pipeline_mode<synchronous>, transform_indices = @transform_4, window_bounds = array<i64: 32, 32>}, {pipeline_mode = #tpu.pipeline_mode<synchronous>, transform_indices = @transform_5, window_bounds = array<i64: 128, 384>}, {pipeline_mode = #tpu.pipeline_mode<synchronous>, transform_indices = @transform_6, window_bounds = array<i64: 128, 128>}, {pipeline_mode = #tpu.pipeline_mode<synchronous>, transform_indices = @transform_7, window_bounds = array<i64: 128, 256>}, {pipeline_mode = #tpu.pipeline_mode<synchronous>, transform_indices = @transform_8, window_bounds = array<i64: 256, 128>}, {pipeline_mode = #tpu.pipeline_mode<synchronous>, transform_indices = @transform_9, window_bounds = array<i64: 32, 128>}, {pipeline_mode = #tpu.pipeline_mode<synchronous>, transform_indices = @transform_10, window_bounds = array<i64: 128, 128>}, {pipeline_mode = #tpu.pipeline_mode<synchronous>, transform_indices = @transform_11, window_bounds = array<i64: 128, 128>}, {pipeline_mode = #tpu.pipeline_mode<synchronous>, transform_indices = @transform_12, window_bounds = array<i64: 1, 128>}, {pipeline_mode = #tpu.pipeline_mode<synchronous>, transform_indices = @transform_13, window_bounds = array<i64: 1, 128>}, {pipeline_mode = #tpu.pipeline_mode<synchronous>, transform_indices = @transform_14, window_bounds = array<i64: 1, 128>}, {pipeline_mode = #tpu.pipeline_mode<synchronous>, transform_indices = @transform_15, window_bounds = array<i64: 1, 128>}, {transform_indices = @transform_16, window_bounds = array<i64: 2, 2, 128>}]} {
    %c0 = arith.constant 0 : index
    %c0_0 = arith.constant 0 : index
    %c0_1 = arith.constant 0 : index
    %0 = vector.load %arg1[%c0, %c0_0, %c0_1] : memref<2x2x128xf32, #tpu.memory_space<vmem>>, vector<2x2x128xf32>
    %1 = vector.shape_cast %0 : vector<2x2x128xf32> to vector<4x128xf32>
    %c0_2 = arith.constant 0 : index
    %c0_3 = arith.constant 0 : index
    %c0_4 = arith.constant 0 : index
    %2 = vector.load %arg2[%c0_2, %c0_3, %c0_4] : memref<2x8x32xf32, #tpu.memory_space<vmem>>, vector<2x8x32xf32>
    %3 = vector.shape_cast %2 : vector<2x8x32xf32> to vector<16x32xf32>
    %c0_5 = arith.constant 0 : index
    %c0_6 = arith.constant 0 : index
    %c0_7 = arith.constant 0 : index
    %4 = vector.load %arg3[%c0_5, %c0_6, %c0_7] : memref<2x8x32xf32, #tpu.memory_space<vmem>>, vector<2x8x32xf32>
    %5 = vector.shape_cast %4 : vector<2x8x32xf32> to vector<16x32xf32>
    %c0_8 = arith.constant 0 : index
    %c0_9 = arith.constant 0 : index
    %6 = vector.load %arg4[%c0_8, %c0_9] : memref<32x32xf32, #tpu.memory_space<vmem>>, vector<32x32xf32>
    %cst = arith.constant dense<0.000000e+00> : vector<16x32xf32>
    %7 = tpu.matmul %3, %6, %cst {dimension_numbers = #tpu.dot_dimension_numbers<[1], [0], [0], [1], [0, 0, 1, 1], [], []>} : vector<16x32xf32>, vector<32x32xf32>, vector<16x32xf32> -> vector<16x32xf32>
    %c0_10 = arith.constant 0 : index
    %c0_11 = arith.constant 0 : index
    %8 = vector.load %arg5[%c0_10, %c0_11] : memref<32x32xf32, #tpu.memory_space<vmem>>, vector<32x32xf32>
    %cst_12 = arith.constant dense<0.000000e+00> : vector<16x32xf32>
    %9 = tpu.matmul %5, %8, %cst_12 {dimension_numbers = #tpu.dot_dimension_numbers<[1], [0], [0], [1], [0, 0, 1, 1], [], []>} : vector<16x32xf32>, vector<32x32xf32>, vector<16x32xf32> -> vector<16x32xf32>
    %cst_13 = arith.constant 0.000000e+00 : f32
    %10 = vector.broadcast %cst_13 : f32 to vector<16x32xf32>
    %11 = arith.cmpf ogt, %7, %10 : vector<16x32xf32>
    %cst_14 = arith.constant 1.000000e+00 : f32
    %12 = vector.broadcast %cst_14 : f32 to vector<16x32xf32>
    %13 = arith.addf %7, %12 : vector<16x32xf32>
    %cst_15 = arith.constant 0.000000e+00 : f32
    %14 = vector.broadcast %cst_15 : f32 to vector<16x32xf32>
    %15 = arith.minimumf %7, %14 : vector<16x32xf32>
    %16 = math.exp %15 : vector<16x32xf32>
    %17 = arith.select %11, %13, %16 : vector<16x32xi1>, vector<16x32xf32>
    %18 = vector.shape_cast %17 : vector<16x32xf32> to vector<2x8x32xf32>
    %19 = vector.shape_cast %9 : vector<16x32xf32> to vector<2x8x32xf32>
    "tpu.trace_start"() <{level = 10 : i32, message = "nsc,nsd->ncd"}> : () -> ()
    %cst_16 = arith.constant dense<0.000000e+00> : vector<2x32x32xf32>
    %20 = tpu.matmul %18, %19, %cst_16 {dimension_numbers = #tpu.dot_dimension_numbers<[1], [1], [2], [2], [0, 0, 0, 2, 1, 2], [0], [0]>} : vector<2x8x32xf32>, vector<2x8x32xf32>, vector<2x32x32xf32> -> vector<2x32x32xf32>
    "tpu.trace_stop"() : () -> ()
    %cst_17 = arith.constant dense<0.000000e+00> : vector<2x32xf32>
    %21 = vector.multi_reduction <add>, %18, %cst_17 [1] : vector<2x8x32xf32> to vector<2x32xf32>
    %c0_18 = arith.constant 0 : index
    %c0_19 = arith.constant 0 : index
    %22 = vector.load %arg10[%c0_18, %c0_19] : memref<32x128xf32, #tpu.memory_space<vmem>>, vector<32x128xf32>
    %23 = vector.shape_cast %20 : vector<2x32x32xf32> to vector<64x32xf32>
    %cst_20 = arith.constant dense<0.000000e+00> : vector<64x128xf32>
    %24 = tpu.matmul %23, %22, %cst_20 {dimension_numbers = #tpu.dot_dimension_numbers<[1], [0], [0], [1], [0, 0, 1, 1], [], []>} : vector<64x32xf32>, vector<32x128xf32>, vector<64x128xf32> -> vector<64x128xf32>
    %25 = vector.shape_cast %24 : vector<64x128xf32> to vector<2x32x128xf32>
    %26 = tpu.concatenate %25, %25, %25, %25 in 1 : vector<2x32x128xf32>, vector<2x32x128xf32>, vector<2x32x128xf32>, vector<2x32x128xf32> -> vector<2x128x128xf32>
    %c0_21 = arith.constant 0 : index
    %c0_22 = arith.constant 0 : index
    %27 = vector.load %arg11[%c0_21, %c0_22] : memref<128x128xf32, #tpu.memory_space<vmem>>, vector<128x128xf32>
    %28 = vector.shape_cast %27 : vector<128x128xf32> to vector<1x128x128xf32>
    %29 = vector.broadcast %28 : vector<1x128x128xf32> to vector<2x128x128xf32>
    %30 = arith.mulf %26, %29 : vector<2x128x128xf32>
    %cst_23 = arith.constant dense<0.000000e+00> : vector<2x128xf32>
    %31 = tpu.matmul %21, %22, %cst_23 {dimension_numbers = #tpu.dot_dimension_numbers<[1], [0], [0], [1], [0, 0, 1, 1], [], []>} : vector<2x32xf32>, vector<32x128xf32>, vector<2x128xf32> -> vector<2x128xf32>
    %c0_24 = arith.constant 0 : index
    %c0_25 = arith.constant 0 : index
    %32 = vector.load %arg6[%c0_24, %c0_25] : memref<128x384xf32, #tpu.memory_space<vmem>>, vector<128x384xf32>
    %cst_26 = arith.constant dense<0.000000e+00> : vector<4x384xf32>
    %33 = tpu.matmul %1, %32, %cst_26 {dimension_numbers = #tpu.dot_dimension_numbers<[1], [0], [0], [1], [0, 0, 1, 1], [], []>} : vector<4x128xf32>, vector<128x384xf32>, vector<4x384xf32> -> vector<4x384xf32>
    %34 = vector.extract_strided_slice %33 {offsets = [0, 0], sizes = [4, 128], strides = [1, 1]} : vector<4x384xf32> to vector<4x128xf32>
    %cst_27 = arith.constant 0.000000e+00 : f32
    %35 = vector.broadcast %cst_27 : f32 to vector<4x128xf32>
    %36 = arith.cmpf ogt, %34, %35 : vector<4x128xf32>
    %cst_28 = arith.constant 1.000000e+00 : f32
    %37 = vector.broadcast %cst_28 : f32 to vector<4x128xf32>
    %38 = arith.addf %34, %37 : vector<4x128xf32>
    %cst_29 = arith.constant 0.000000e+00 : f32
    %39 = vector.broadcast %cst_29 : f32 to vector<4x128xf32>
    %40 = arith.minimumf %34, %39 : vector<4x128xf32>
    %41 = math.exp %40 : vector<4x128xf32>
    %42 = arith.select %36, %38, %41 : vector<4x128xi1>, vector<4x128xf32>
    %43 = vector.extract_strided_slice %33 {offsets = [0, 128], sizes = [4, 256], strides = [1, 1]} : vector<4x384xf32> to vector<4x256xf32>
    %44 = vector.shape_cast %42 : vector<4x128xf32> to vector<2x2x128xf32>
    "tpu.trace_start"() <{level = 10 : i32, message = "nrc,ncd->nrd"}> : () -> ()
    %cst_30 = arith.constant dense<0.000000e+00> : vector<2x2x128xf32>
    %45 = tpu.matmul %44, %30, %cst_30 {dimension_numbers = #tpu.dot_dimension_numbers<[2], [1], [1], [2], [0, 0, 0, 1, 1, 2], [0], [0]>} : vector<2x2x128xf32>, vector<2x128x128xf32>, vector<2x2x128xf32> -> vector<2x2x128xf32>
    "tpu.trace_stop"() : () -> ()
    %46 = vector.shape_cast %45 : vector<2x2x128xf32> to vector<4x128xf32>
    %47 = vector.shape_cast %31 : vector<2x128xf32> to vector<2x1x128xf32>
    %48 = vector.broadcast %47 : vector<2x1x128xf32> to vector<2x2x128xf32>
    %49 = arith.mulf %44, %48 : vector<2x2x128xf32>
    %50 = vector.shape_cast %49 : vector<2x2x128xf32> to vector<4x128xf32>
    %c0_31 = arith.constant 0 : index
    %c0_32 = arith.constant 0 : index
    %51 = vector.load %arg11[%c0_31, %c0_32] : memref<128x128xf32, #tpu.memory_space<vmem>>, vector<128x128xf32>
    %cst_33 = arith.constant dense<0.000000e+00> : vector<4x128xf32>
    %52 = tpu.matmul %50, %51, %cst_33 {dimension_numbers = #tpu.dot_dimension_numbers<[1], [0], [0], [1], [0, 0, 1, 1], [], []>} : vector<4x128xf32>, vector<128x128xf32>, vector<4x128xf32> -> vector<4x128xf32>
    %cst_34 = arith.constant 9.99999997E-7 : f32
    %53 = vector.broadcast %cst_34 : f32 to vector<4x128xf32>
    %54 = arith.addf %52, %53 : vector<4x128xf32>
    %55 = arith.divf %46, %54 : vector<4x128xf32>
    %c0_35 = arith.constant 0 : index
    %c0_36 = arith.constant 0 : index
    %56 = vector.load %arg7[%c0_35, %c0_36] : memref<128x128xf32, #tpu.memory_space<vmem>>, vector<128x128xf32>
    %cst_37 = arith.constant dense<0.000000e+00> : vector<4x128xf32>
    %57 = tpu.matmul %55, %56, %cst_37 {dimension_numbers = #tpu.dot_dimension_numbers<[1], [0], [0], [1], [0, 0, 1, 1], [], []>} : vector<4x128xf32>, vector<128x128xf32>, vector<4x128xf32> -> vector<4x128xf32>
    %c0_38 = arith.constant 0 : index
    %c0_39 = arith.constant 0 : index
    %58 = vector.load %arg12[%c0_38, %c0_39] : memref<128x128xf32, #tpu.memory_space<vmem>>, vector<128x128xf32>
    %c0_40 = arith.constant 0 : index
    %c0_41 = arith.constant 0 : index
    %59 = vector.load %arg13[%c0_40, %c0_41] : memref<1x128xf32, #tpu.memory_space<vmem>>, vector<1x128xf32>
    %c0_42 = arith.constant 0 : index
    %c0_43 = arith.constant 0 : index
    %60 = vector.load %arg14[%c0_42, %c0_43] : memref<1x128xf32, #tpu.memory_space<vmem>>, vector<1x128xf32>
    %cst_44 = arith.constant dense<0.000000e+00> : vector<4x128xf32>
    %61 = tpu.matmul %57, %58, %cst_44 {dimension_numbers = #tpu.dot_dimension_numbers<[1], [0], [0], [1], [0, 0, 1, 1], [], []>} : vector<4x128xf32>, vector<128x128xf32>, vector<4x128xf32> -> vector<4x128xf32>
    %62 = arith.subf %57, %61 : vector<4x128xf32>
    %63 = arith.mulf %62, %62 : vector<4x128xf32>
    %cst_45 = arith.constant dense<0.000000e+00> : vector<4x128xf32>
    %64 = tpu.matmul %63, %58, %cst_45 {dimension_numbers = #tpu.dot_dimension_numbers<[1], [0], [0], [1], [0, 0, 1, 1], [], []>} : vector<4x128xf32>, vector<128x128xf32>, vector<4x128xf32> -> vector<4x128xf32>
    %cst_46 = arith.constant 9.99999974E-6 : f32
    %65 = vector.broadcast %cst_46 : f32 to vector<4x128xf32>
    %66 = arith.addf %64, %65 : vector<4x128xf32>
    %67 = math.rsqrt %66 : vector<4x128xf32>
    %68 = arith.mulf %62, %67 : vector<4x128xf32>
    %69 = vector.broadcast %59 : vector<1x128xf32> to vector<4x128xf32>
    %70 = arith.mulf %68, %69 : vector<4x128xf32>
    %71 = vector.broadcast %60 : vector<1x128xf32> to vector<4x128xf32>
    %72 = arith.addf %70, %71 : vector<4x128xf32>
    %c0_47 = arith.constant 0 : index
    %c0_48 = arith.constant 0 : index
    %73 = vector.load %arg8[%c0_47, %c0_48] : memref<128x256xf32, #tpu.memory_space<vmem>>, vector<128x256xf32>
    %cst_49 = arith.constant dense<0.000000e+00> : vector<4x256xf32>
    %74 = tpu.matmul %72, %73, %cst_49 {dimension_numbers = #tpu.dot_dimension_numbers<[1], [0], [0], [1], [0, 0, 1, 1], [], []>} : vector<4x128xf32>, vector<128x256xf32>, vector<4x256xf32> -> vector<4x256xf32>
    %75 = arith.addf %43, %74 : vector<4x256xf32>
    %cst_50 = arith.constant 0.000000e+00 : f32
    %76 = vector.broadcast %cst_50 : f32 to vector<4x256xf32>
    %77 = arith.maximumf %75, %76 : vector<4x256xf32>
    %c0_51 = arith.constant 0 : index
    %c0_52 = arith.constant 0 : index
    %78 = vector.load %arg9[%c0_51, %c0_52] : memref<256x128xf32, #tpu.memory_space<vmem>>, vector<256x128xf32>
    %cst_53 = arith.constant dense<0.000000e+00> : vector<4x128xf32>
    %79 = tpu.matmul %77, %78, %cst_53 {dimension_numbers = #tpu.dot_dimension_numbers<[1], [0], [0], [1], [0, 0, 1, 1], [], []>} : vector<4x256xf32>, vector<256x128xf32>, vector<4x128xf32> -> vector<4x128xf32>
    %c0_54 = arith.constant 0 : index
    %c0_55 = arith.constant 0 : index
    %80 = vector.load %arg12[%c0_54, %c0_55] : memref<128x128xf32, #tpu.memory_space<vmem>>, vector<128x128xf32>
    %c0_56 = arith.constant 0 : index
    %c0_57 = arith.constant 0 : index
    %81 = vector.load %arg15[%c0_56, %c0_57] : memref<1x128xf32, #tpu.memory_space<vmem>>, vector<1x128xf32>
    %c0_58 = arith.constant 0 : index
    %c0_59 = arith.constant 0 : index
    %82 = vector.load %arg16[%c0_58, %c0_59] : memref<1x128xf32, #tpu.memory_space<vmem>>, vector<1x128xf32>
    %cst_60 = arith.constant dense<0.000000e+00> : vector<4x128xf32>
    %83 = tpu.matmul %79, %80, %cst_60 {dimension_numbers = #tpu.dot_dimension_numbers<[1], [0], [0], [1], [0, 0, 1, 1], [], []>} : vector<4x128xf32>, vector<128x128xf32>, vector<4x128xf32> -> vector<4x128xf32>
    %84 = arith.subf %79, %83 : vector<4x128xf32>
    %85 = arith.mulf %84, %84 : vector<4x128xf32>
    %cst_61 = arith.constant dense<0.000000e+00> : vector<4x128xf32>
    %86 = tpu.matmul %85, %80, %cst_61 {dimension_numbers = #tpu.dot_dimension_numbers<[1], [0], [0], [1], [0, 0, 1, 1], [], []>} : vector<4x128xf32>, vector<128x128xf32>, vector<4x128xf32> -> vector<4x128xf32>
    %cst_62 = arith.constant 9.99999974E-6 : f32
    %87 = vector.broadcast %cst_62 : f32 to vector<4x128xf32>
    %88 = arith.addf %86, %87 : vector<4x128xf32>
    %89 = math.rsqrt %88 : vector<4x128xf32>
    %90 = arith.mulf %84, %89 : vector<4x128xf32>
    %91 = vector.broadcast %81 : vector<1x128xf32> to vector<4x128xf32>
    %92 = arith.mulf %90, %91 : vector<4x128xf32>
    %93 = vector.broadcast %82 : vector<1x128xf32> to vector<4x128xf32>
    %94 = arith.addf %92, %93 : vector<4x128xf32>
    %95 = arith.addf %1, %94 : vector<4x128xf32>
    %96 = vector.shape_cast %95 : vector<4x128xf32> to vector<2x2x128xf32>
    %c0_63 = arith.constant 0 : index
    %c0_64 = arith.constant 0 : index
    %c0_65 = arith.constant 0 : index
    %97 = vector.load %arg17[%c0_63, %c0_64, %c0_65] : memref<2x2x128xf32, #tpu.memory_space<vmem>>, vector<2x2x128xf32>
    tpu.vector_store %arg17[%c0_63, %c0_64, %c0_65], %96 {strides = array<i32>} : memref<2x2x128xf32, #tpu.memory_space<vmem>>, vector<2x2x128xf32>,
    return
  }
  func.func @transform_0(%arg0: i32) -> (i32, i32, i32) {
    %c0_i32 = arith.constant 0 : i32
    %c0_i32_0 = arith.constant 0 : i32
    %c0_i32_1 = arith.constant 0 : i32
    return %arg0, %c0_i32, %c0_i32_0 : i32, i32, i32
  }
  func.func @transform_1(%arg0: i32) -> (i32, i32, i32) {
    %c0_i32 = arith.constant 0 : i32
    %c0_i32_0 = arith.constant 0 : i32
    %c0_i32_1 = arith.constant 0 : i32
    return %arg0, %c0_i32, %c0_i32_0 : i32, i32, i32
  }
  func.func @transform_2(%arg0: i32) -> (i32, i32, i32) {
    %c0_i32 = arith.constant 0 : i32
    %c0_i32_0 = arith.constant 0 : i32
    %c0_i32_1 = arith.constant 0 : i32
    return %arg0, %c0_i32, %c0_i32_0 : i32, i32, i32
  }
  func.func @transform_3(%arg0: i32) -> (i32, i32) {
    %c0_i32 = arith.constant 0 : i32
    %c0_i32_0 = arith.constant 0 : i32
    %c0_i32_1 = arith.constant 0 : i32
    return %c0_i32, %c0_i32_0 : i32, i32
  }
  func.func @transform_4(%arg0: i32) -> (i32, i32) {
    %c0_i32 = arith.constant 0 : i32
    %c0_i32_0 = arith.constant 0 : i32
    %c0_i32_1 = arith.constant 0 : i32
    return %c0_i32, %c0_i32_0 : i32, i32
  }
  func.func @transform_5(%arg0: i32) -> (i32, i32) {
    %c0_i32 = arith.constant 0 : i32
    %c0_i32_0 = arith.constant 0 : i32
    %c0_i32_1 = arith.constant 0 : i32
    return %c0_i32, %c0_i32_0 : i32, i32
  }
  func.func @transform_6(%arg0: i32) -> (i32, i32) {
    %c0_i32 = arith.constant 0 : i32
    %c0_i32_0 = arith.constant 0 : i32
    %c0_i32_1 = arith.constant 0 : i32
    return %c0_i32, %c0_i32_0 : i32, i32
  }
  func.func @transform_7(%arg0: i32) -> (i32, i32) {
    %c0_i32 = arith.constant 0 : i32
    %c0_i32_0 = arith.constant 0 : i32
    %c0_i32_1 = arith.constant 0 : i32
    return %c0_i32, %c0_i32_0 : i32, i32
  }
  func.func @transform_8(%arg0: i32) -> (i32, i32) {
    %c0_i32 = arith.constant 0 : i32
    %c0_i32_0 = arith.constant 0 : i32
    %c0_i32_1 = arith.constant 0 : i32
    return %c0_i32, %c0_i32_0 : i32, i32
  }
  func.func @transform_9(%arg0: i32) -> (i32, i32) {
    %c0_i32 = arith.constant 0 : i32
    %c0_i32_0 = arith.constant 0 : i32
    %c0_i32_1 = arith.constant 0 : i32
    return %c0_i32, %c0_i32_0 : i32, i32
  }
  func.func @transform_10(%arg0: i32) -> (i32, i32) {
    %c0_i32 = arith.constant 0 : i32
    %c0_i32_0 = arith.constant 0 : i32
    %c0_i32_1 = arith.constant 0 : i32
    return %c0_i32, %c0_i32_0 : i32, i32
  }
  func.func @transform_11(%arg0: i32) -> (i32, i32) {
    %c0_i32 = arith.constant 0 : i32
    %c0_i32_0 = arith.constant 0 : i32
    %c0_i32_1 = arith.constant 0 : i32
    return %c0_i32, %c0_i32_0 : i32, i32
  }
  func.func @transform_12(%arg0: i32) -> (i32, i32) {
    %c0_i32 = arith.constant 0 : i32
    %c0_i32_0 = arith.constant 0 : i32
    %c0_i32_1 = arith.constant 0 : i32
    return %c0_i32, %c0_i32_0 : i32, i32
  }
  func.func @transform_13(%arg0: i32) -> (i32, i32) {
    %c0_i32 = arith.constant 0 : i32
    %c0_i32_0 = arith.constant 0 : i32
    %c0_i32_1 = arith.constant 0 : i32
    return %c0_i32, %c0_i32_0 : i32, i32
  }
  func.func @transform_14(%arg0: i32) -> (i32, i32) {
    %c0_i32 = arith.constant 0 : i32
    %c0_i32_0 = arith.constant 0 : i32
    %c0_i32_1 = arith.constant 0 : i32
    return %c0_i32, %c0_i32_0 : i32, i32
  }
  func.func @transform_15(%arg0: i32) -> (i32, i32) {
    %c0_i32 = arith.constant 0 : i32
    %c0_i32_0 = arith.constant 0 : i32
    %c0_i32_1 = arith.constant 0 : i32
    return %c0_i32, %c0_i32_0 : i32, i32
  }
  func.func @transform_16(%arg0: i32) -> (i32, i32, i32) {
    %c0_i32 = arith.constant 0 : i32
    %c0_i32_0 = arith.constant 0 : i32
    %c0_i32_1 = arith.constant 0 : i32
    return %arg0, %c0_i32, %c0_i32_0 : i32, i32, i32
  }
}

</mosaic_0001>

<llo_original>
// kernel: tpu_custom_call.1
$region0: #{tpu_custom_call.1}
  #allocation0 [shape = 'u32[]', space=smem, size = 0x4, offset = 0x4, fixed_abs, tag = 'smem constant byte address 0x4 - core index']
  #allocation1 [shape = 'u32[72,128]{1,0:T(1,128)}', space=vmem, size = 0x9000, scoped, tag = 'internal scratch']
  %s0 = inlined_call_operand.hbm [shape: f32[2,2,128], index: 0, kind: input, shape index: {}]
  %s1 = inlined_call_operand.hbm [shape: f32[2,8,32], index: 1, kind: input, shape index: {}]
  %s2 = inlined_call_operand.hbm [shape: f32[2,8,32], index: 2, kind: input, shape index: {}]
  %s3 = inlined_call_operand.hbm [shape: f32[32,32], index: 3, kind: input, shape index: {}]
  %s4 = inlined_call_operand.hbm [shape: f32[32,32], index: 4, kind: input, shape index: {}]
  %s5 = inlined_call_operand.hbm [shape: f32[128,384], index: 5, kind: input, shape index: {}]
  %s6 = inlined_call_operand.hbm [shape: f32[128,128], index: 6, kind: input, shape index: {}]
  %s7 = inlined_call_operand.hbm [shape: f32[128,256], index: 7, kind: input, shape index: {}]
  %s8 = inlined_call_operand.hbm [shape: f32[256,128], index: 8, kind: input, shape index: {}]
  %s9 = inlined_call_operand.hbm [shape: f32[32,128], index: 9, kind: input, shape index: {}]
  %s10 = inlined_call_operand.hbm [shape: f32[128,128], index: 10, kind: input, shape index: {}]
  %s11 = inlined_call_operand.hbm [shape: f32[128,128], index: 11, kind: input, shape index: {}]
  %s12 = inlined_call_operand.vmem [shape: f32[1,128], index: 12, kind: input, shape index: {}]
  %s13 = inlined_call_operand.vmem [shape: f32[1,128], index: 13, kind: input, shape index: {}]
  %s14 = inlined_call_operand.vmem [shape: f32[1,128], index: 14, kind: input, shape index: {}]
  %s15 = inlined_call_operand.vmem [shape: f32[1,128], index: 15, kind: input, shape index: {}]
  %s16 = inlined_call_operand.hbm [shape: f32[2,2,128], index: 16, kind: output, shape index: {}]
  %s17 = sld [smem:[#allocation0]]
  $region122: #{tpu_custom_call.1} parent=0
    _
  %s19 = ssub.s32 1, %s17
  %s20 = scalar_select 0, %s19, %s17
  $region1: #{tpu_custom_call.1} parent=0
    #allocation2 [shape = 'u8[2048]{0}', space=vmem, size = 0x800, scoped, tag = 'input window, operand 0, single buffered']
    #allocation3 [shape = 's32[1]{0}', space=sflag, size = 0x4, scoped, tag = 'scoped memory for tpu_custom_call.1']
    #allocation4 [shape = 's32[1]{0}', space=sflag, size = 0x4, scoped, tag = 'scoped memory for tpu_custom_call.1']
    #allocation5 [shape = 'u8[8192]{0}', space=vmem, size = 0x2000, scoped, tag = 'input window, operand 1, single buffered']
    #allocation6 [shape = 's32[1]{0}', space=sflag, size = 0x4, scoped, tag = 'scoped memory for tpu_custom_call.1']
    #allocation7 [shape = 'u8[8192]{0}', space=vmem, size = 0x2000, scoped, tag = 'input window, operand 2, single buffered']
    #allocation8 [shape = 'u8[16384]{0}', space=vmem, size = 0x4000, scoped, tag = 'input window, operand 3, single buffered']
    #allocation9 [shape = 's32[1]{0}', space=sflag, size = 0x4, scoped, tag = 'scoped memory for tpu_custom_call.1']
    #allocation10 [shape = 'u8[16384]{0}', space=vmem, size = 0x4000, scoped, tag = 'input window, operand 4, single buffered']
    #allocation11 [shape = 'u8[196608]{0}', space=vmem, size = 0x30000, scoped, tag = 'input window, operand 5, single buffered']
    #allocation12 [shape = 's32[1]{0}', space=sflag, size = 0x4, scoped, tag = 'scoped memory for tpu_custom_call.1']
    #allocation13 [shape = 'u8[65536]{0}', space=vmem, size = 0x10000, scoped, tag = 'input window, operand 6, single buffered']
    #allocation14 [shape = 'u8[131072]{0}', space=vmem, size = 0x20000, scoped, tag = 'input window, operand 7, single buffered']
    #allocation15 [shape = 's32[1]{0}', space=sflag, size = 0x4, scoped, tag = 'scoped memory for tpu_custom_call.1']
    #allocation16 [shape = 'u8[131072]{0}', space=vmem, size = 0x20000, scoped, tag = 'input window, operand 8, single buffered']
    #allocation17 [shape = 'u8[16384]{0}', space=vmem, size = 0x4000, scoped, tag = 'input window, operand 9, single buffered']
    #allocation18 [shape = 's32[1]{0}', space=sflag, size = 0x4, scoped, tag = 'scoped memory for tpu_custom_call.1']
    #allocation19 [shape = 'u8[65536]{0}', space=vmem, size = 0x10000, scoped, tag = 'input window, operand 10, single buffered']
    #allocation20 [shape = 'u8[65536]{0}', space=vmem, size = 0x10000, scoped, tag = 'input window, operand 11, single buffered']
    #allocation21 [shape = 's32[1]{0}', space=sflag, size = 0x4, scoped, tag = 'scoped memory for tpu_custom_call.1']
    #allocation22 [shape = 'u8[2048]{0}', space=vmem, size = 0x800, scoped, tag = 'output window, operand 0, single buffered']
    %21 = vsyncpa [#allocation3], 0
    %22 = vsyncpa [#allocation6], 0
    %23 = vsyncpa [#allocation9], 0
    %24 = vsyncpa [#allocation12], 0
    %25 = vsyncpa [#allocation15], 0
    %26 = vsyncpa [#allocation18], 0
    %27 = vsyncpa [#allocation21], 0
    %28 = vsyncpa [#allocation4], 0
    // Predicated region
    $region2: #{tpu_custom_call.1} parent=1 // pred_check
      _
    $region3: #{tpu_custom_call.1} parent=1 // pred_check_branch
      %30 = sbr.rel (0) target = $region5
    $region4: #{tpu_custom_call.1} parent=1 // pred_region
      %32 = vsyncadd [#allocation3], 0
      %s33 = sshll.u32 %s0, 4
      %s34 = int_to_ptr.hbm [resolvable:$true] %s33
      %s35 = sshll.u32 [#allocation2], 4
      %s36 = int_to_ptr.vmem [resolvable:$true] %s35
      %41 = dma.hbm_to_vmem [thread:$0]  %s34, 64, %s36, [#allocation3], 32, 32, 2
    $region5: #{tpu_custom_call.1} parent=1 // pred_fallthru
      _
    // Predicated region
    $region6: #{tpu_custom_call.1} parent=1 // pred_check
      _
    $region7: #{tpu_custom_call.1} parent=1 // pred_check_branch
      %43 = sbr.rel (0) target = $region9
    $region8: #{tpu_custom_call.1} parent=1 // pred_region
      %45 = vsyncadd [#allocation6], 0
      %s46 = sshll.u32 %s1, 4
      %s47 = int_to_ptr.hbm [resolvable:$true] %s46
      %s48 = sshll.u32 [#allocation5], 4
      %s49 = int_to_ptr.vmem [resolvable:$true] %s48
      %54 = dma.hbm_to_vmem [thread:$0]  %s47, 256, %s49, [#allocation6], 128, 128, 8
    $region9: #{tpu_custom_call.1} parent=1 // pred_fallthru
      _
    // Predicated region
    $region10: #{tpu_custom_call.1} parent=1 // pred_check
      _
    $region11: #{tpu_custom_call.1} parent=1 // pred_check_branch
      %56 = sbr.rel (0) target = $region13
    $region12: #{tpu_custom_call.1} parent=1 // pred_region
      %58 = vsyncadd [#allocation6], 0
      %s59 = sshll.u32 %s2, 4
      %s60 = int_to_ptr.hbm [resolvable:$true] %s59
      %s61 = sshll.u32 [#allocation7], 4
      %s62 = int_to_ptr.vmem [resolvable:$true] %s61
      %67 = dma.hbm_to_vmem [thread:$0]  %s60, 256, %s62, [#allocation6], 128, 128, 8
    $region13: #{tpu_custom_call.1} parent=1 // pred_fallthru
      _
    // Predicated region
    $region14: #{tpu_custom_call.1} parent=1 // pred_check
      _
    $region15: #{tpu_custom_call.1} parent=1 // pred_check_branch
      %69 = sbr.rel (0) target = $region17
    $region16: #{tpu_custom_call.1} parent=1 // pred_region
      %71 = vsyncadd [#allocation9], 0
      %s72 = sshll.u32 %s3, 4
      %s73 = int_to_ptr.hbm [resolvable:$true] %s72
      %s74 = sshll.u32 [#allocation8], 4
      %s75 = int_to_ptr.vmem [resolvable:$true] %s74
      %80 = dma.hbm_to_vmem [thread:$0]  %s73, 512, %s75, [#allocation9], 128, 128, 8
    $region17: #{tpu_custom_call.1} parent=1 // pred_fallthru
      _
    // Predicated region
    $region18: #{tpu_custom_call.1} parent=1 // pred_check
      _
    $region19: #{tpu_custom_call.1} parent=1 // pred_check_branch
      %82 = sbr.rel (0) target = $region21
    $region20: #{tpu_custom_call.1} parent=1 // pred_region
      %84 = vsyncadd [#allocation9], 0
      %s85 = sshll.u32 %s4, 4
      %s86 = int_to_ptr.hbm [resolvable:$true] %s85
      %s87 = sshll.u32 [#allocation10], 4
      %s88 = int_to_ptr.vmem [resolvable:$true] %s87
      %93 = dma.hbm_to_vmem [thread:$0]  %s86, 512, %s88, [#allocation9], 128, 128, 8
    $region21: #{tpu_custom_call.1} parent=1 // pred_fallthru
      _
    // Predicated region
    $region22: #{tpu_custom_call.1} parent=1 // pred_check
      _
    $region23: #{tpu_custom_call.1} parent=1 // pred_check_branch
      %95 = sbr.rel (0) target = $region25
    $region24: #{tpu_custom_call.1} parent=1 // pred_region
      %97 = vsyncadd [#allocation12], 0
      %s98 = sshll.u32 %s5, 4
      %s99 = int_to_ptr.hbm [resolvable:$true] %s98
      %s100 = sshll.u32 [#allocation11], 4
      %s101 = int_to_ptr.vmem [resolvable:$true] %s100
      %106 = dma.hbm_to_vmem [thread:$0]  %s99, 6144, %s101, [#allocation12], 384, 384, 24
    $region25: #{tpu_custom_call.1} parent=1 // pred_fallthru
      _
    // Predicated region
    $region26: #{tpu_custom_call.1} parent=1 // pred_check
      _
    $region27: #{tpu_custom_call.1} parent=1 // pred_check_branch
      %108 = sbr.rel (0) target = $region29
    $region28: #{tpu_custom_call.1} parent=1 // pred_region
      %110 = vsyncadd [#allocation12], 0
      %s111 = sshll.u32 %s6, 4
      %s112 = int_to_ptr.hbm [resolvable:$true] %s111
      %s113 = sshll.u32 [#allocation13], 4
      %s114 = int_to_ptr.vmem [resolvable:$true] %s113
      %119 = dma.hbm_to_vmem [thread:$0]  %s112, 2048, %s114, [#allocation12], 128, 128, 8
    $region29: #{tpu_custom_call.1} parent=1 // pred_fallthru
      _
    // Predicated region
    $region30: #{tpu_custom_call.1} parent=1 // pred_check
      _
    $region31: #{tpu_custom_call.1} parent=1 // pred_check_branch
      %121 = sbr.rel (0) target = $region33
    $region32: #{tpu_custom_call.1} parent=1 // pred_region
      %123 = vsyncadd [#allocation15], 0
      %s124 = sshll.u32 %s7, 4
      %s125 = int_to_ptr.hbm [resolvable:$true] %s124
      %s126 = sshll.u32 [#allocation14], 4
      %s127 = int_to_ptr.vmem [resolvable:$true] %s126
      %132 = dma.hbm_to_vmem [thread:$0]  %s125, 4096, %s127, [#allocation15], 256, 256, 16
    $region33: #{tpu_custom_call.1} parent=1 // pred_fallthru
      _
    // Predicated region
    $region34: #{tpu_custom_call.1} parent=1 // pred_check
      _
    $region35: #{tpu_custom_call.1} parent=1 // pred_check_branch
      %134 = sbr.rel (0) target = $region37
    $region36: #{tpu_custom_call.1} parent=1 // pred_region
      %136 = vsyncadd [#allocation15], 0
      %s137 = sshll.u32 %s8, 4
      %s138 = int_to_ptr.hbm [resolvable:$true] %s137
      %s139 = sshll.u32 [#allocation16], 4
      %s140 = int_to_ptr.vmem [resolvable:$true] %s139
      %145 = dma.hbm_to_vmem [thread:$0]  %s138, 4096, %s140, [#allocation15], 128, 128, 8
    $region37: #{tpu_custom_call.1} parent=1 // pred_fallthru
      _
    // Predicated region
    $region38: #{tpu_custom_call.1} parent=1 // pred_check
      _
    $region39: #{tpu_custom_call.1} parent=1 // pred_check_branch
      %147 = sbr.rel (0) target = $region41
    $region40: #{tpu_custom_call.1} parent=1 // pred_region
      %149 = vsyncadd [#allocation18], 0
      %s150 = sshll.u32 %s9, 4
      %s151 = int_to_ptr.hbm [resolvable:$true] %s150
      %s152 = sshll.u32 [#allocation17], 4
      %s153 = int_to_ptr.vmem [resolvable:$true] %s152
      %158 = dma.hbm_to_vmem [thread:$0]  %s151, 512, %s153, [#allocation18], 128, 128, 8
    $region41: #{tpu_custom_call.1} parent=1 // pred_fallthru
      _
    // Predicated region
    $region42: #{tpu_custom_call.1} parent=1 // pred_check
      _
    $region43: #{tpu_custom_call.1} parent=1 // pred_check_branch
      %160 = sbr.rel (0) target = $region45
    $region44: #{tpu_custom_call.1} parent=1 // pred_region
      %162 = vsyncadd [#allocation18], 0
      %s163 = sshll.u32 %s10, 4
      %s164 = int_to_ptr.hbm [resolvable:$true] %s163
      %s165 = sshll.u32 [#allocation19], 4
      %s166 = int_to_ptr.vmem [resolvable:$true] %s165
      %171 = dma.hbm_to_vmem [thread:$0]  %s164, 2048, %s166, [#allocation18], 128, 128, 8
    $region45: #{tpu_custom_call.1} parent=1 // pred_fallthru
      _
    // Predicated region
    $region46: #{tpu_custom_call.1} parent=1 // pred_check
      _
    $region47: #{tpu_custom_call.1} parent=1 // pred_check_branch
      %173 = sbr.rel (0) target = $region49
    $region48: #{tpu_custom_call.1} parent=1 // pred_region
      %175 = vsyncadd [#allocation21], 0
      %s176 = sshll.u32 %s11, 4
      %s177 = int_to_ptr.hbm [resolvable:$true] %s176
      %s178 = sshll.u32 [#allocation20], 4
      %s179 = int_to_ptr.vmem [resolvable:$true] %s178
      %184 = dma.hbm_to_vmem [thread:$0]  %s177, 2048, %s179, [#allocation21], 128, 128, 8
    $region49: #{tpu_custom_call.1} parent=1 // pred_fallthru
      _
    // Predicated region
    $region50: #{tpu_custom_call.1} parent=1 // pred_check
      _
    $region51: #{tpu_custom_call.1} parent=1 // pred_check_branch
      %186 = sbr.rel (0) target = $region53
    $region52: #{tpu_custom_call.1} parent=1 // pred_region
      _
    $region53: #{tpu_custom_call.1} parent=1 // pred_fallthru
      _
    // Predicated region
    $region54: #{tpu_custom_call.1} parent=1 // pred_check
      _
    $region55: #{tpu_custom_call.1} parent=1 // pred_check_branch
      %188 = sbr.rel (0) target = $region57
    $region56: #{tpu_custom_call.1} parent=1 // pred_region
      _
    $region57: #{tpu_custom_call.1} parent=1 // pred_fallthru
      _
    // Predicated region
    $region58: #{tpu_custom_call.1} parent=1 // pred_check
      _
    $region59: #{tpu_custom_call.1} parent=1 // pred_check_branch
      %190 = sbr.rel (0) target = $region61
    $region60: #{tpu_custom_call.1} parent=1 // pred_region
      _
    $region61: #{tpu_custom_call.1} parent=1 // pred_fallthru
      _
    // Predicated region
    $region62: #{tpu_custom_call.1} parent=1 // pred_check
      _
    $region63: #{tpu_custom_call.1} parent=1 // pred_check_branch
      %192 = sbr.rel (0) target = $region65
    $region64: #{tpu_custom_call.1} parent=1 // pred_region
      _
    $region65: #{tpu_custom_call.1} parent=1 // pred_fallthru
      _
    // Predicated region
    $region66: #{tpu_custom_call.1} parent=1 // pred_check
      _
    $region67: #{tpu_custom_call.1} parent=1 // pred_check_branch
      %194 = sbr.rel (0) target = $region69
    $region68: #{tpu_custom_call.1} parent=1 // pred_region
      %196 = dma.done [#allocation3], 64
    $region69: #{tpu_custom_call.1} parent=1 // pred_fallthru
      _
    // Predicated region
    $region70: #{tpu_custom_call.1} parent=1 // pred_check
      _
    $region71: #{tpu_custom_call.1} parent=1 // pred_check_branch
      %198 = sbr.rel (0) target = $region73
    $region72: #{tpu_custom_call.1} parent=1 // pred_region
      %200 = dma.done [#allocation6], 256
    $region73: #{tpu_custom_call.1} parent=1 // pred_fallthru
      _
    // Predicated region
    $region74: #{tpu_custom_call.1} parent=1 // pred_check
      _
    $region75: #{tpu_custom_call.1} parent=1 // pred_check_branch
      %202 = sbr.rel (0) target = $region77
    $region76: #{tpu_custom_call.1} parent=1 // pred_region
      %204 = dma.done [#allocation6], 256
    $region77: #{tpu_custom_call.1} parent=1 // pred_fallthru
      _
    // Predicated region
    $region78: #{tpu_custom_call.1} parent=1 // pred_check
      _
    $region79: #{tpu_custom_call.1} parent=1 // pred_check_branch
      %206 = sbr.rel (0) target = $region81
    $region80: #{tpu_custom_call.1} parent=1 // pred_region
      %208 = dma.done [#allocation9], 512
    $region81: #{tpu_custom_call.1} parent=1 // pred_fallthru
      _
    // Predicated region
    $region82: #{tpu_custom_call.1} parent=1 // pred_check
      _
    $region83: #{tpu_custom_call.1} parent=1 // pred_check_branch
      %210 = sbr.rel (0) target = $region85
    $region84: #{tpu_custom_call.1} parent=1 // pred_region
      %212 = dma.done [#allocation9], 512
    $region85: #{tpu_custom_call.1} parent=1 // pred_fallthru
      _
    // Predicated region
    $region86: #{tpu_custom_call.1} parent=1 // pred_check
      _
    $region87: #{tpu_custom_call.1} parent=1 // pred_check_branch
      %214 = sbr.rel (0) target = $region89
    $region88: #{tpu_custom_call.1} parent=1 // pred_region
      %216 = dma.done [#allocation12], 6144
    $region89: #{tpu_custom_call.1} parent=1 // pred_fallthru
      _
    // Predicated region
    $region90: #{tpu_custom_call.1} parent=1 // pred_check
      _
    $region91: #{tpu_custom_call.1} parent=1 // pred_check_branch
      %218 = sbr.rel (0) target = $region93
    $region92: #{tpu_custom_call.1} parent=1 // pred_region
      %220 = dma.done [#allocation12], 2048
    $region93: #{tpu_custom_call.1} parent=1 // pred_fallthru
      _
    // Predicated region
    $region94: #{tpu_custom_call.1} parent=1 // pred_check
      _
    $region95: #{tpu_custom_call.1} parent=1 // pred_check_branch
      %222 = sbr.rel (0) target = $region97
    $region96: #{tpu_custom_call.1} parent=1 // pred_region
      %224 = dma.done [#allocation15], 4096
    $region97: #{tpu_custom_call.1} parent=1 // pred_fallthru
      _
    // Predicated region
    $region98: #{tpu_custom_call.1} parent=1 // pred_check
      _
    $region99: #{tpu_custom_call.1} parent=1 // pred_check_branch
      %226 = sbr.rel (0) target = $region101
    $region100: #{tpu_custom_call.1} parent=1 // pred_region
      %228 = dma.done [#allocation15], 4096
    $region101: #{tpu_custom_call.1} parent=1 // pred_fallthru
      _
    // Predicated region
    $region102: #{tpu_custom_call.1} parent=1 // pred_check
      _
    $region103: #{tpu_custom_call.1} parent=1 // pred_check_branch
      %230 = sbr.rel (0) target = $region105
    $region104: #{tpu_custom_call.1} parent=1 // pred_region
      %232 = dma.done [#allocation18], 512
    $region105: #{tpu_custom_call.1} parent=1 // pred_fallthru
      _
    // Predicated region
    $region106: #{tpu_custom_call.1} parent=1 // pred_check
      _
    $region107: #{tpu_custom_call.1} parent=1 // pred_check_branch
      %234 = sbr.rel (0) target = $region109
    $region108: #{tpu_custom_call.1} parent=1 // pred_region
      %236 = dma.done [#allocation18], 2048
    $region109: #{tpu_custom_call.1} parent=1 // pred_fallthru
      _
    // Predicated region
    $region110: #{tpu_custom_call.1} parent=1 // pred_check
      _
    $region111: #{tpu_custom_call.1} parent=1 // pred_check_branch
      %238 = sbr.rel (0) target = $region113
    $region112: #{tpu_custom_call.1} parent=1 // pred_region
      %240 = dma.done [#allocation21], 2048
    $region113: #{tpu_custom_call.1} parent=1 // pred_fallthru
      _
    %v241 = vld [vmem:[#allocation2] sm:$0x3]
    %v242 = vld [vmem:[#allocation2 + $0x2] sm:$0x3]
    %v243 = vld [vmem:[#allocation5] sm:$0xff]
    %v244 = vld [vmem:[#allocation5 + $0x8] sm:$0xff]
    %v245 = vld [vmem:[#allocation7] sm:$0xff]
    %v246 = vld [vmem:[#allocation7 + $0x8] sm:$0xff]
    %v247 = vld [vmem:[#allocation8] sm:$0xff]
    %v248 = vld [vmem:[#allocation8 + $0x8] sm:$0xff]
    %v249 = vld [vmem:[#allocation8 + $0x10] sm:$0xff]
    %v250 = vld [vmem:[#allocation8 + $0x18] sm:$0xff]
    %vm251 = vcmask 261120
    %v253 = vsel %vm251, %v243, 0
    %v256 = vsel %vm251, %v244, 0
    %258 = vmatpush.msra.mxu0 0.0
    %259 = vmatpush.msra.mxu0 0.0
    %260 = vmatpush.msra.mxu0 0.0
    %261 = vmatpush.msra.mxu0 0.0
    %262 = vmatpush.msra.mxu0 0.0
    %263 = vmatpush.msra.mxu0 0.0
    %264 = vmatpush.msra.mxu0 0.0
    %265 = vmatpush.msra.mxu0 0.0
    %266 = vmatpush.msra.mxu0 0.0
    %267 = vmatpush.msra.mxu0 0.0
    %268 = vmatpush.msra.mxu0 0.0
    %269 = vmatpush.msra.mxu0 0.0
    %270 = vmatpush.msra.mxu0 %v250
    %271 = vmatpush.msra.mxu0 %v249
    %272 = vmatpush.msra.mxu0 %v248
    %273 = vmatpush.msra.mxu0 %v247
    %274 = vmatmul.f32.gmra.mxu0 %v253
    %v275 = vpop.f32.mrf.mxu0
    %v276 = vadd.f32 0.0, %v275
    %277 = vmatmul.f32.gmra.mxu0 %v256
    %v278 = vpop.f32.mrf.mxu0
    %v279 = vadd.f32 0.0, %v278
    %280 = vdwg.mxu0
    %v281 = vld [vmem:[#allocation10] sm:$0xff]
    %v282 = vld [vmem:[#allocation10 + $0x8] sm:$0xff]
    %v283 = vld [vmem:[#allocation10 + $0x10] sm:$0xff]
    %v284 = vld [vmem:[#allocation10 + $0x18] sm:$0xff]
    %v286 = vsel %vm251, %v245, 0
    %v289 = vsel %vm251, %v246, 0
    %291 = vmatpush.msra.mxu0 0.0
    %292 = vmatpush.msra.mxu0 0.0
    %293 = vmatpush.msra.mxu0 0.0
    %294 = vmatpush.msra.mxu0 0.0
    %295 = vmatpush.msra.mxu0 0.0
    %296 = vmatpush.msra.mxu0 0.0
    %297 = vmatpush.msra.mxu0 0.0
    %298 = vmatpush.msra.mxu0 0.0
    %299 = vmatpush.msra.mxu0 0.0
    %300 = vmatpush.msra.mxu0 0.0
    %301 = vmatpush.msra.mxu0 0.0
    %302 = vmatpush.msra.mxu0 0.0
    %303 = vmatpush.msra.mxu0 %v284
    %304 = vmatpush.msra.mxu0 %v283
    %305 = vmatpush.msra.mxu0 %v282
    %306 = vmatpush.msra.mxu0 %v281
    %307 = vmatmul.f32.gmra.mxu0 %v286
    %v308 = vpop.f32.mrf.mxu0
    %v309 = vadd.f32 0.0, %v308
    %310 = vmatmul.f32.gmra.mxu0 %v289
    %v311 = vpop.f32.mrf.mxu0
    %v312 = vadd.f32 0.0, %v311
    %313 = vdwg.mxu0
    %vm314 = vcmp.gt.f32.partialorder %v276, 0.0
    %vm315 = vcmp.gt.f32.partialorder %v279, 0.0
    %v316 = vadd.f32 %v276, 1.0
    %v317 = vadd.f32 %v279, 1.0
    %v318 = vmin.f32 %v276, 0.0
    %v319 = vmin.f32 %v279, 0.0
    %v320 = vmul.f32 %v318, 1.442695
    %v321 = vpow.pop %v320
    %v322 = vmul.f32 %v319, 1.442695
    %v323 = vpow.pop %v322
    %v324 = vsel %vm314, %v316, %v321
    %v325 = vsel %vm315, %v317, %v323
    %326 = vxpose.xlu0.b32.start [1/16] %v324, 128
    %327 = vxpose.xlu0.b32.cont [2/16] 0.0, 128
    %328 = vxpose.xlu0.b32.cont [3/16] 0.0, 128
    %329 = vxpose.xlu0.b32.cont [4/16] 0.0, 128
    %330 = vxpose.xlu0.b32.cont [5/16] 0.0, 128
    %331 = vxpose.xlu0.b32.cont [6/16] 0.0, 128
    %332 = vxpose.xlu0.b32.cont [7/16] 0.0, 128
    %333 = vxpose.xlu0.b32.cont [8/16] 0.0, 128
    %334 = vxpose.xlu0.b32.cont [9/16] 0.0, 128
    %335 = vxpose.xlu0.b32.cont [10/16] 0.0, 128
    %336 = vxpose.xlu0.b32.cont [11/16] 0.0, 128
    %337 = vxpose.xlu0.b32.cont [12/16] 0.0, 128
    %338 = vxpose.xlu0.b32.cont [13/16] 0.0, 128
    %339 = vxpose.xlu0.b32.cont [14/16] 0.0, 128
    %340 = vxpose.xlu0.b32.cont [15/16] 0.0, 128
    %341 = vxpose.xlu0.b32.end [16/16] 0.0, 128
    %v342 = vpop.trf.xlu0
    %v343 = vpop.trf.xlu0
    %v344 = vpop.trf.xlu0
    %v345 = vpop.trf.xlu0
    %v346 = vpop.trf.xlu0
    %v347 = vpop.trf.xlu0
    %v348 = vpop.trf.xlu0
    %v349 = vpop.trf.xlu0
    %v350 = vpop.trf.xlu0
    %v351 = vpop.trf.xlu0
    %v352 = vpop.trf.xlu0
    %v353 = vpop.trf.xlu0
    %v354 = vpop.trf.xlu0
    %v355 = vpop.trf.xlu0
    %v356 = vpop.trf.xlu0
    %v357 = vpop.trf.xlu0
    %vm358 = vcmask 64512
    %v360 = vsel %vm358, %v342, 0
    %v363 = vsel %vm358, %v343, 0
    %v366 = vsel %vm358, %v344, 0
    %v369 = vsel %vm358, %v345, 0
    %371 = vmatpush.msra.mxu0 0.0
    %372 = vmatpush.msra.mxu0 0.0
    %373 = vmatpush.msra.mxu0 0.0
    %374 = vmatpush.msra.mxu0 0.0
    %375 = vmatpush.msra.mxu0 0.0
    %376 = vmatpush.msra.mxu0 0.0
    %377 = vmatpush.msra.mxu0 0.0
    %378 = vmatpush.msra.mxu0 0.0
    %379 = vmatpush.msra.mxu0 0.0
    %380 = vmatpush.msra.mxu0 0.0
    %381 = vmatpush.msra.mxu0 0.0
    %382 = vmatpush.msra.mxu0 0.0
    %383 = vmatpush.msra.mxu0 0.0
    %384 = vmatpush.msra.mxu0 0.0
    %385 = vmatpush.msra.mxu0 0.0
    %386 = vmatpush.msra.mxu0 %v309
    %387 = vmatmul.f32.gmra.mxu0 %v360
    %v388 = vpop.f32.mrf.mxu0
    %v389 = vadd.f32 0.0, %v388
    %390 = vmatmul.f32.gmra.mxu0 %v363
    %v391 = vpop.f32.mrf.mxu0
    %v392 = vadd.f32 0.0, %v391
    %393 = vmatmul.f32.gmra.mxu0 %v366
    %v394 = vpop.f32.mrf.mxu0
    %v395 = vadd.f32 0.0, %v394
    %396 = vmatmul.f32.gmra.mxu0 %v369
    %v397 = vpop.f32.mrf.mxu0
    %v398 = vadd.f32 0.0, %v397
    %399 = vdwg.mxu0
    %400 = vxpose.xlu0.b32.start [1/16] %v325, 128
    %401 = vxpose.xlu0.b32.cont [2/16] 0.0, 128
    %402 = vxpose.xlu0.b32.cont [3/16] 0.0, 128
    %403 = vxpose.xlu0.b32.cont [4/16] 0.0, 128
    %404 = vxpose.xlu0.b32.cont [5/16] 0.0, 128
    %405 = vxpose.xlu0.b32.cont [6/16] 0.0, 128
    %406 = vxpose.xlu0.b32.cont [7/16] 0.0, 128
    %407 = vxpose.xlu0.b32.cont [8/16] 0.0, 128
    %408 = vxpose.xlu0.b32.cont [9/16] 0.0, 128
    %409 = vxpose.xlu0.b32.cont [10/16] 0.0, 128
    %410 = vxpose.xlu0.b32.cont [11/16] 0.0, 128
    %411 = vxpose.xlu0.b32.cont [12/16] 0.0, 128
    %412 = vxpose.xlu0.b32.cont [13/16] 0.0, 128
    %413 = vxpose.xlu0.b32.cont [14/16] 0.0, 128
    %414 = vxpose.xlu0.b32.cont [15/16] 0.0, 128
    %415 = vxpose.xlu0.b32.end [16/16] 0.0, 128
    %v416 = vpop.trf.xlu0
    %v417 = vpop.trf.xlu0
    %v418 = vpop.trf.xlu0
    %v419 = vpop.trf.xlu0
    %v420 = vpop.trf.xlu0
    %v421 = vpop.trf.xlu0
    %v422 = vpop.trf.xlu0
    %v423 = vpop.trf.xlu0
    %v424 = vpop.trf.xlu0
    %v425 = vpop.trf.xlu0
    %v426 = vpop.trf.xlu0
    %v427 = vpop.trf.xlu0
    %v428 = vpop.trf.xlu0
    %v429 = vpop.trf.xlu0
    %v430 = vpop.trf.xlu0
    %v431 = vpop.trf.xlu0
    %v433 = vsel %vm358, %v416, 0
    %v436 = vsel %vm358, %v417, 0
    %v439 = vsel %vm358, %v418, 0
    %v442 = vsel %vm358, %v419, 0
    %444 = vmatpush.msra.mxu0 0.0
    %445 = vmatpush.msra.mxu0 0.0
    %446 = vmatpush.msra.mxu0 0.0
    %447 = vmatpush.msra.mxu0 0.0
    %448 = vmatpush.msra.mxu0 0.0
    %449 = vmatpush.msra.mxu0 0.0
    %450 = vmatpush.msra.mxu0 0.0
    %451 = vmatpush.msra.mxu0 0.0
    %452 = vmatpush.msra.mxu0 0.0
    %453 = vmatpush.msra.mxu0 0.0
    %454 = vmatpush.msra.mxu0 0.0
    %455 = vmatpush.msra.mxu0 0.0
    %456 = vmatpush.msra.mxu0 0.0
    %457 = vmatpush.msra.mxu0 0.0
    %458 = vmatpush.msra.mxu0 0.0
    %459 = vmatpush.msra.mxu0 %v312
    %460 = vmatmul.f32.gmra.mxu0 %v433
    %v461 = vpop.f32.mrf.mxu0
    %v462 = vadd.f32 0.0, %v461
    %463 = vmatmul.f32.gmra.mxu0 %v436
    %v464 = vpop.f32.mrf.mxu0
    %v465 = vadd.f32 0.0, %v464
    %466 = vmatmul.f32.gmra.mxu0 %v439
    %v467 = vpop.f32.mrf.mxu0
    %v468 = vadd.f32 0.0, %v467
    %469 = vmatmul.f32.gmra.mxu0 %v442
    %v470 = vpop.f32.mrf.mxu0
    %v471 = vadd.f32 0.0, %v470
    %472 = vdwg.mxu0
    %v473 = vsel %vm251, %v324, 0.0
    %v474 = vrot.slane %v473, 4
    %v475 = vadd.f32 %v473, %v474
    %v476 = vrot.slane %v475, 2
    %v477 = vadd.f32 %v475, %v476
    %v478 = vrot.slane %v477, 1
    %v479 = vadd.f32 %v477, %v478
    %v480 = vsel %vm251, %v325, 0.0
    %v481 = vrot.slane %v480, 4
    %v482 = vadd.f32 %v480, %v481
    %v483 = vrot.slane %v482, 2
    %v484 = vadd.f32 %v482, %v483
    %v485 = vrot.slane %v484, 1
    %v486 = vadd.f32 %v484, %v485
    %v487 = vld [vmem:[#allocation17] sm:$0xff]
    %v488 = vld [vmem:[#allocation17 + $0x8] sm:$0xff]
    %v489 = vld [vmem:[#allocation17 + $0x10] sm:$0xff]
    %v490 = vld [vmem:[#allocation17 + $0x18] sm:$0xff]
    %v492 = vsel %vm251, %v389, 0
    %v495 = vsel %vm251, %v392, 0
    %v498 = vsel %vm251, %v395, 0
    %v501 = vsel %vm251, %v398, 0
    %v504 = vsel %vm251, %v462, 0
    %v507 = vsel %vm251, %v465, 0
    %v510 = vsel %vm251, %v468, 0
    %v513 = vsel %vm251, %v471, 0
    %515 = vmatpush.msra.mxu0 0.0
    %516 = vmatpush.msra.mxu0 0.0
    %517 = vmatpush.msra.mxu0 0.0
    %518 = vmatpush.msra.mxu0 0.0
    %519 = vmatpush.msra.mxu0 0.0
    %520 = vmatpush.msra.mxu0 0.0
    %521 = vmatpush.msra.mxu0 0.0
    %522 = vmatpush.msra.mxu0 0.0
    %523 = vmatpush.msra.mxu0 0.0
    %524 = vmatpush.msra.mxu0 0.0
    %525 = vmatpush.msra.mxu0 0.0
    %526 = vmatpush.msra.mxu0 0.0
    %527 = vmatpush.msra.mxu0 %v490
    %528 = vmatpush.msra.mxu0 %v489
    %529 = vmatpush.msra.mxu0 %v488
    %530 = vmatpush.msra.mxu0 %v487
    %531 = vmatmul.f32.gmra.mxu0 %v492
    %v532 = vpop.f32.mrf.mxu0
    %v533 = vadd.f32 0.0, %v532
    %534 = vmatmul.f32.gmra.mxu0 %v495
    %v535 = vpop.f32.mrf.mxu0
    %v536 = vadd.f32 0.0, %v535
    %537 = vmatmul.f32.gmra.mxu0 %v498
    %v538 = vpop.f32.mrf.mxu0
    %v539 = vadd.f32 0.0, %v538
    %540 = vmatmul.f32.gmra.mxu0 %v501
    %v541 = vpop.f32.mrf.mxu0
    %v542 = vadd.f32 0.0, %v541
    %543 = vmatmul.f32.gmra.mxu0 %v504
    %v544 = vpop.f32.mrf.mxu0
    %v545 = vadd.f32 0.0, %v544
    %546 = vmatmul.f32.gmra.mxu0 %v507
    %v547 = vpop.f32.mrf.mxu0
    %v548 = vadd.f32 0.0, %v547
    %549 = vmatmul.f32.gmra.mxu0 %v510
    %v550 = vpop.f32.mrf.mxu0
    %v551 = vadd.f32 0.0, %v550
    %552 = vmatmul.f32.gmra.mxu0 %v513
    %v553 = vpop.f32.mrf.mxu0
    %v554 = vadd.f32 0.0, %v553
    %555 = vdwg.mxu0
    %v556 = vld [vmem:[#allocation19] sm:$0xff]
    %v557 = vld [vmem:[#allocation19 + $0x8] sm:$0xff]
    %v558 = vld [vmem:[#allocation19 + $0x10] sm:$0xff]
    %v559 = vld [vmem:[#allocation19 + $0x18] sm:$0xff]
    %v560 = vld [vmem:[#allocation19 + $0x20] sm:$0xff]
    %v561 = vld [vmem:[#allocation19 + $0x28] sm:$0xff]
    %v562 = vld [vmem:[#allocation19 + $0x30] sm:$0xff]
    %v563 = vld [vmem:[#allocation19 + $0x38] sm:$0xff]
    %v564 = vld [vmem:[#allocation19 + $0x40] sm:$0xff]
    %v565 = vld [vmem:[#allocation19 + $0x48] sm:$0xff]
    %v566 = vld [vmem:[#allocation19 + $0x50] sm:$0xff]
    %v567 = vld [vmem:[#allocation19 + $0x58] sm:$0xff]
    %v568 = vld [vmem:[#allocation19 + $0x60] sm:$0xff]
    %v569 = vld [vmem:[#allocation19 + $0x68] sm:$0xff]
    %v570 = vld [vmem:[#allocation19 + $0x70] sm:$0xff]
    %v571 = vld [vmem:[#allocation19 + $0x78] sm:$0xff]
    %v572 = vmul.f32 %v533, %v556
    %v573 = vmul.f32 %v536, %v557
    %v574 = vmul.f32 %v539, %v558
    %v575 = vmul.f32 %v542, %v559
    %v576 = vmul.f32 %v533, %v560
    %v577 = vmul.f32 %v536, %v561
    %v578 = vmul.f32 %v539, %v562
    %v579 = vmul.f32 %v542, %v563
    %v580 = vmul.f32 %v533, %v564
    %v581 = vmul.f32 %v536, %v565
    %v582 = vmul.f32 %v539, %v566
    %v583 = vmul.f32 %v542, %v567
    %v584 = vmul.f32 %v533, %v568
    %v585 = vmul.f32 %v536, %v569
    %v586 = vmul.f32 %v539, %v570
    %v587 = vmul.f32 %v542, %v571
    %v588 = vmul.f32 %v545, %v556
    %v589 = vmul.f32 %v548, %v557
    %v590 = vmul.f32 %v551, %v558
    %v591 = vmul.f32 %v554, %v559
    %v592 = vmul.f32 %v545, %v560
    %v593 = vmul.f32 %v548, %v561
    %v594 = vmul.f32 %v551, %v562
    %v595 = vmul.f32 %v554, %v563
    %v596 = vmul.f32 %v545, %v564
    %v597 = vmul.f32 %v548, %v565
    %v598 = vmul.f32 %v551, %v566
    %v599 = vmul.f32 %v554, %v567
    %v600 = vmul.f32 %v545, %v568
    %v601 = vmul.f32 %v548, %v569
    %v602 = vmul.f32 %v551, %v570
    %v603 = vmul.f32 %v554, %v571
    %vm606 = vcmask 1041409
    %v607 = vsel %vm606, %v486, %v479
    %v608 = vsel %vm251, %v607, 0
    %610 = vmatpush.msra.mxu0 0.0
    %611 = vmatpush.msra.mxu0 0.0
    %612 = vmatpush.msra.mxu0 0.0
    %613 = vmatpush.msra.mxu0 0.0
    %614 = vmatpush.msra.mxu0 0.0
    %615 = vmatpush.msra.mxu0 0.0
    %616 = vmatpush.msra.mxu0 0.0
    %617 = vmatpush.msra.mxu0 0.0
    %618 = vmatpush.msra.mxu0 0.0
    %619 = vmatpush.msra.mxu0 0.0
    %620 = vmatpush.msra.mxu0 0.0
    %621 = vmatpush.msra.mxu0 0.0
    %622 = vmatpush.msra.mxu0 %v490
    %623 = vmatpush.msra.mxu0 %v489
    %624 = vmatpush.msra.mxu0 %v488
    %625 = vmatpush.msra.mxu0 %v487
    %626 = vmatmul.f32.gmra.mxu0 %v608
    %v627 = vpop.f32.mrf.mxu0
    %v628 = vadd.f32 0.0, %v627
    %629 = vdwg.mxu0
    %v630 = vld [vmem:[#allocation11] sm:$0xff]
    %v631 = vld [vmem:[#allocation11 + $0x8] sm:$0xff]
    %v632 = vld [vmem:[#allocation11 + $0x10] sm:$0xff]
    %v633 = vld [vmem:[#allocation11 + $0x18] sm:$0xff]
    %v634 = vld [vmem:[#allocation11 + $0x20] sm:$0xff]
    %v635 = vld [vmem:[#allocation11 + $0x28] sm:$0xff]
    %v636 = vld [vmem:[#allocation11 + $0x30] sm:$0xff]
    %v637 = vld [vmem:[#allocation11 + $0x38] sm:$0xff]
    %v638 = vld [vmem:[#allocation11 + $0x40] sm:$0xff]
    %v639 = vld [vmem:[#allocation11 + $0x48] sm:$0xff]
    %v640 = vld [vmem:[#allocation11 + $0x50] sm:$0xff]
    %v641 = vld [vmem:[#allocation11 + $0x58] sm:$0xff]
    %v642 = vld [vmem:[#allocation11 + $0x60] sm:$0xff]
    %v643 = vld [vmem:[#allocation11 + $0x68] sm:$0xff]
    %v644 = vld [vmem:[#allocation11 + $0x70] sm:$0xff]
    %v645 = vld [vmem:[#allocation11 + $0x78] sm:$0xff]
    %v646 = vld [vmem:[#allocation11 + $0x80] sm:$0xff]
    %v647 = vld [vmem:[#allocation11 + $0x88] sm:$0xff]
    %v648 = vld [vmem:[#allocation11 + $0x90] sm:$0xff]
    %v649 = vld [vmem:[#allocation11 + $0x98] sm:$0xff]
    %v650 = vld [vmem:[#allocation11 + $0xa0] sm:$0xff]
    %v651 = vld [vmem:[#allocation11 + $0xa8] sm:$0xff]
    %v652 = vld [vmem:[#allocation11 + $0xb0] sm:$0xff]
    %v653 = vld [vmem:[#allocation11 + $0xb8] sm:$0xff]
    %v654 = vld [vmem:[#allocation11 + $0xc0] sm:$0xff]
    %v655 = vld [vmem:[#allocation11 + $0xc8] sm:$0xff]
    %v656 = vld [vmem:[#allocation11 + $0xd0] sm:$0xff]
    %v657 = vld [vmem:[#allocation11 + $0xd8] sm:$0xff]
    %v658 = vld [vmem:[#allocation11 + $0xe0] sm:$0xff]
    %v659 = vld [vmem:[#allocation11 + $0xe8] sm:$0xff]
    %v660 = vld [vmem:[#allocation11 + $0xf0] sm:$0xff]
    %v661 = vld [vmem:[#allocation11 + $0xf8] sm:$0xff]
    %v662 = vld [vmem:[#allocation11 + $0x100] sm:$0xff]
    %v663 = vld [vmem:[#allocation11 + $0x108] sm:$0xff]
    %v664 = vld [vmem:[#allocation11 + $0x110] sm:$0xff]
    %v665 = vld [vmem:[#allocation11 + $0x118] sm:$0xff]
    %v666 = vld [vmem:[#allocation11 + $0x120] sm:$0xff]
    %v667 = vld [vmem:[#allocation11 + $0x128] sm:$0xff]
    %v668 = vld [vmem:[#allocation11 + $0x130] sm:$0xff]
    %v669 = vld [vmem:[#allocation11 + $0x138] sm:$0xff]
    %v670 = vld [vmem:[#allocation11 + $0x140] sm:$0xff]
    %v671 = vld [vmem:[#allocation11 + $0x148] sm:$0xff]
    %v672 = vld [vmem:[#allocation11 + $0x150] sm:$0xff]
    %v673 = vld [vmem:[#allocation11 + $0x158] sm:$0xff]
    %v674 = vld [vmem:[#allocation11 + $0x160] sm:$0xff]
    %v675 = vld [vmem:[#allocation11 + $0x168] sm:$0xff]
    %v676 = vld [vmem:[#allocation11 + $0x170] sm:$0xff]
    %v677 = vld [vmem:[#allocation11 + $0x178] sm:$0xff]
    %680 = vst [vmem:[#allocation1] ss:$4 sm:$0xff] %v241
    %s681 = scalar_lea.vmem [#allocation1], 1
    %682 = vst [vmem:[%s681] ss:$4 sm:$0xff] %v242
    %v683 = vld.sshfl [vmem:[#allocation1] sm:$0xff pattern:$0x73625140]
    %685 = vmatpush.msra.mxu0 %v675
    %686 = vmatpush.msra.mxu0 %v672
    %687 = vmatpush.msra.mxu0 %v669
    %688 = vmatpush.msra.mxu0 %v666
    %689 = vmatpush.msra.mxu0 %v663
    %690 = vmatpush.msra.mxu0 %v660
    %691 = vmatpush.msra.mxu0 %v657
    %692 = vmatpush.msra.mxu0 %v654
    %693 = vmatpush.msra.mxu0 %v651
    %694 = vmatpush.msra.mxu0 %v648
    %695 = vmatpush.msra.mxu0 %v645
    %696 = vmatpush.msra.mxu0 %v642
    %697 = vmatpush.msra.mxu0 %v639
    %698 = vmatpush.msra.mxu0 %v636
    %699 = vmatpush.msra.mxu0 %v633
    %700 = vmatpush.msra.mxu0 %v630
    %701 = vmatmul.f32.gmra.mxu0 %v683
    %v702 = vpop.f32.mrf.mxu0
    %v703 = vadd.f32 0.0, %v702
    %704 = vdwg.mxu0
    %705 = vmatpush.msra.mxu0 %v676
    %706 = vmatpush.msra.mxu0 %v673
    %707 = vmatpush.msra.mxu0 %v670
    %708 = vmatpush.msra.mxu0 %v667
    %709 = vmatpush.msra.mxu0 %v664
    %710 = vmatpush.msra.mxu0 %v661
    %711 = vmatpush.msra.mxu0 %v658
    %712 = vmatpush.msra.mxu0 %v655
    %713 = vmatpush.msra.mxu0 %v652
    %714 = vmatpush.msra.mxu0 %v649
    %715 = vmatpush.msra.mxu0 %v646
    %716 = vmatpush.msra.mxu0 %v643
    %717 = vmatpush.msra.mxu0 %v640
    %718 = vmatpush.msra.mxu0 %v637
    %719 = vmatpush.msra.mxu0 %v634
    %720 = vmatpush.msra.mxu0 %v631
    %721 = vmatmul.f32.gmra.mxu0 %v683
    %v722 = vpop.f32.mrf.mxu0
    %v723 = vadd.f32 0.0, %v722
    %724 = vdwg.mxu0
    %725 = vmatpush.msra.mxu0 %v677
    %726 = vmatpush.msra.mxu0 %v674
    %727 = vmatpush.msra.mxu0 %v671
    %728 = vmatpush.msra.mxu0 %v668
    %729 = vmatpush.msra.mxu0 %v665
    %730 = vmatpush.msra.mxu0 %v662
    %731 = vmatpush.msra.mxu0 %v659
    %732 = vmatpush.msra.mxu0 %v656
    %733 = vmatpush.msra.mxu0 %v653
    %734 = vmatpush.msra.mxu0 %v650
    %735 = vmatpush.msra.mxu0 %v647
    %736 = vmatpush.msra.mxu0 %v644
    %737 = vmatpush.msra.mxu0 %v641
    %738 = vmatpush.msra.mxu0 %v638
    %739 = vmatpush.msra.mxu0 %v635
    %740 = vmatpush.msra.mxu0 %v632
    %741 = vmatmul.f32.gmra.mxu0 %v683
    %v742 = vpop.f32.mrf.mxu0
    %v743 = vadd.f32 0.0, %v742
    %744 = vdwg.mxu0
    %vm745 = vcmp.gt.f32.partialorder %v703, 0.0
    %v746 = vadd.f32 %v703, 1.0
    %v747 = vmin.f32 %v703, 0.0
    %v748 = vmul.f32 %v747, 1.442695
    %v749 = vpow.pop %v748
    %v750 = vsel %vm745, %v746, %v749
    %v752 = vrot.slane %v750, 2
    %754 = vmatpush.msra.mxu0 %v587
    %755 = vmatpush.msra.mxu0 %v586
    %756 = vmatpush.msra.mxu0 %v585
    %757 = vmatpush.msra.mxu0 %v584
    %758 = vmatpush.msra.mxu0 %v583
    %759 = vmatpush.msra.mxu0 %v582
    %760 = vmatpush.msra.mxu0 %v581
    %761 = vmatpush.msra.mxu0 %v580
    %762 = vmatpush.msra.mxu0 %v579
    %763 = vmatpush.msra.mxu0 %v578
    %764 = vmatpush.msra.mxu0 %v577
    %765 = vmatpush.msra.mxu0 %v576
    %766 = vmatpush.msra.mxu0 %v575
    %767 = vmatpush.msra.mxu0 %v574
    %768 = vmatpush.msra.mxu0 %v573
    %769 = vmatpush.msra.mxu0 %v572
    %770 = vmatmul.f32.gmra.mxu0 %v750
    %v771 = vpop.f32.mrf.mxu0
    %v772 = vadd.f32 0.0, %v771
    %773 = vdwg.mxu0
    %774 = vmatpush.msra.mxu0 %v603
    %775 = vmatpush.msra.mxu0 %v602
    %776 = vmatpush.msra.mxu0 %v601
    %777 = vmatpush.msra.mxu0 %v600
    %778 = vmatpush.msra.mxu0 %v599
    %779 = vmatpush.msra.mxu0 %v598
    %780 = vmatpush.msra.mxu0 %v597
    %781 = vmatpush.msra.mxu0 %v596
    %782 = vmatpush.msra.mxu0 %v595
    %783 = vmatpush.msra.mxu0 %v594
    %784 = vmatpush.msra.mxu0 %v593
    %785 = vmatpush.msra.mxu0 %v592
    %786 = vmatpush.msra.mxu0 %v591
    %787 = vmatpush.msra.mxu0 %v590
    %788 = vmatpush.msra.mxu0 %v589
    %789 = vmatpush.msra.mxu0 %v588
    %790 = vmatmul.f32.gmra.mxu0 %v752
    %v791 = vpop.f32.mrf.mxu0
    %v792 = vadd.f32 0.0, %v791
    %793 = vdwg.mxu0
    %v795 = vrot.slane %v628, 1
    %v796 = vperm.slane %v628, 0
    %v797 = vperm.slane %v795, 0
    %v800 = vmul.f32 %v750, %v796
    %v801 = vmul.f32 %v752, %v797
    %v802 = vld [vmem:[#allocation19] sm:$0xff]
    %v803 = vld [vmem:[#allocation19 + $0x8] sm:$0xff]
    %v804 = vld [vmem:[#allocation19 + $0x10] sm:$0xff]
    %v805 = vld [vmem:[#allocation19 + $0x18] sm:$0xff]
    %v806 = vld [vmem:[#allocation19 + $0x20] sm:$0xff]
    %v807 = vld [vmem:[#allocation19 + $0x28] sm:$0xff]
    %v808 = vld [vmem:[#allocation19 + $0x30] sm:$0xff]
    %v809 = vld [vmem:[#allocation19 + $0x38] sm:$0xff]
    %v810 = vld [vmem:[#allocation19 + $0x40] sm:$0xff]
    %v811 = vld [vmem:[#allocation19 + $0x48] sm:$0xff]
    %v812 = vld [vmem:[#allocation19 + $0x50] sm:$0xff]
    %v813 = vld [vmem:[#allocation19 + $0x58] sm:$0xff]
    %v814 = vld [vmem:[#allocation19 + $0x60] sm:$0xff]
    %v815 = vld [vmem:[#allocation19 + $0x68] sm:$0xff]
    %v816 = vld [vmem:[#allocation19 + $0x70] sm:$0xff]
    %v817 = vld [vmem:[#allocation19 + $0x78] sm:$0xff]
    %820 = vst [vmem:[#allocation1] ss:$4 sm:$0xff] %v800
    %s821 = scalar_lea.vmem [#allocation1], 1
    %822 = vst [vmem:[%s821] ss:$4 sm:$0xff] %v801
    %v823 = vld.sshfl [vmem:[#allocation1] sm:$0xff pattern:$0x73625140]
    %825 = vmatpush.msra.mxu0 %v817
    %826 = vmatpush.msra.mxu0 %v816
    %827 = vmatpush.msra.mxu0 %v815
    %828 = vmatpush.msra.mxu0 %v814
    %829 = vmatpush.msra.mxu0 %v813
    %830 = vmatpush.msra.mxu0 %v812
    %831 = vmatpush.msra.mxu0 %v811
    %832 = vmatpush.msra.mxu0 %v810
    %833 = vmatpush.msra.mxu0 %v809
    %834 = vmatpush.msra.mxu0 %v808
    %835 = vmatpush.msra.mxu0 %v807
    %836 = vmatpush.msra.mxu0 %v806
    %837 = vmatpush.msra.mxu0 %v805
    %838 = vmatpush.msra.mxu0 %v804
    %839 = vmatpush.msra.mxu0 %v803
    %840 = vmatpush.msra.mxu0 %v802
    %841 = vmatmul.f32.gmra.mxu0 %v823
    %v842 = vpop.f32.mrf.mxu0
    %v843 = vadd.f32 1e-06, %v842
    %844 = vdwg.mxu0
    %v846 = vrot.slane %v843, 2
    %v848 = vrcp.pop %v843
    %v849 = vmul.f32 %v843, %v848
    %v850 = vsub.f32 1.0, %v849
    %v851 = vmul.f32 %v848, %v850
    %v852 = vadd.f32 %v848, %v851
    %vm853 = vweird.f32 %v843
    %vm854 = vweird.f32 %v848
    %vm855 = vmor %vm853, %vm854
    %v856 = vsel %vm855, %v848, %v852
    %v857 = vand.u32 2147483647, %v843
    %vm858 = vcmp.eq.f32.partialorder %v857, 8.507059e+37
    %v859 = vand.u32 %v843, 2147483648
    %v860 = vor.u32 1.1754944e-38, %v859
    %v861 = vsel %vm858, %v860, %v856
    %v862 = vmul.f32 %v772, %v861
    %v863 = vrcp.pop %v846
    %v864 = vmul.f32 %v846, %v863
    %v865 = vsub.f32 1.0, %v864
    %v866 = vmul.f32 %v863, %v865
    %v867 = vadd.f32 %v863, %v866
    %vm868 = vweird.f32 %v846
    %vm869 = vweird.f32 %v863
    %vm870 = vmor %vm868, %vm869
    %v871 = vsel %vm870, %v863, %v867
    %v872 = vand.u32 2147483647, %v846
    %vm873 = vcmp.eq.f32.partialorder %v872, 8.507059e+37
    %v874 = vand.u32 %v846, 2147483648
    %v875 = vor.u32 1.1754944e-38, %v874
    %v876 = vsel %vm873, %v875, %v871
    %v877 = vmul.f32 %v792, %v876
    %v878 = vld [vmem:[#allocation13] sm:$0xff]
    %v879 = vld [vmem:[#allocation13 + $0x8] sm:$0xff]
    %v880 = vld [vmem:[#allocation13 + $0x10] sm:$0xff]
    %v881 = vld [vmem:[#allocation13 + $0x18] sm:$0xff]
    %v882 = vld [vmem:[#allocation13 + $0x20] sm:$0xff]
    %v883 = vld [vmem:[#allocation13 + $0x28] sm:$0xff]
    %v884 = vld [vmem:[#allocation13 + $0x30] sm:$0xff]
    %v885 = vld [vmem:[#allocation13 + $0x38] sm:$0xff]
    %v886 = vld [vmem:[#allocation13 + $0x40] sm:$0xff]
    %v887 = vld [vmem:[#allocation13 + $0x48] sm:$0xff]
    %v888 = vld [vmem:[#allocation13 + $0x50] sm:$0xff]
    %v889 = vld [vmem:[#allocation13 + $0x58] sm:$0xff]
    %v890 = vld [vmem:[#allocation13 + $0x60] sm:$0xff]
    %v891 = vld [vmem:[#allocation13 + $0x68] sm:$0xff]
    %v892 = vld [vmem:[#allocation13 + $0x70] sm:$0xff]
    %v893 = vld [vmem:[#allocation13 + $0x78] sm:$0xff]
    %896 = vst [vmem:[#allocation1] ss:$4 sm:$0xff] %v862
    %s897 = scalar_lea.vmem [#allocation1], 1
    %898 = vst [vmem:[%s897] ss:$4 sm:$0xff] %v877
    %v899 = vld.sshfl [vmem:[#allocation1] sm:$0xff pattern:$0x73625140]
    %901 = vmatpush.msra.mxu0 %v893
    %902 = vmatpush.msra.mxu0 %v892
    %903 = vmatpush.msra.mxu0 %v891
    %904 = vmatpush.msra.mxu0 %v890
    %905 = vmatpush.msra.mxu0 %v889
    %906 = vmatpush.msra.mxu0 %v888
    %907 = vmatpush.msra.mxu0 %v887
    %908 = vmatpush.msra.mxu0 %v886
    %909 = vmatpush.msra.mxu0 %v885
    %910 = vmatpush.msra.mxu0 %v884
    %911 = vmatpush.msra.mxu0 %v883
    %912 = vmatpush.msra.mxu0 %v882
    %913 = vmatpush.msra.mxu0 %v881
    %914 = vmatpush.msra.mxu0 %v880
    %915 = vmatpush.msra.mxu0 %v879
    %916 = vmatpush.msra.mxu0 %v878
    %917 = vmatmul.f32.gmra.mxu0 %v899
    %v918 = vpop.f32.mrf.mxu0
    %v919 = vadd.f32 0.0, %v918
    %920 = vdwg.mxu0
    %v921 = vld [vmem:[#allocation20] sm:$0xff]
    %v922 = vld [vmem:[#allocation20 + $0x8] sm:$0xff]
    %v923 = vld [vmem:[#allocation20 + $0x10] sm:$0xff]
    %v924 = vld [vmem:[#allocation20 + $0x18] sm:$0xff]
    %v925 = vld [vmem:[#allocation20 + $0x20] sm:$0xff]
    %v926 = vld [vmem:[#allocation20 + $0x28] sm:$0xff]
    %v927 = vld [vmem:[#allocation20 + $0x30] sm:$0xff]
    %v928 = vld [vmem:[#allocation20 + $0x38] sm:$0xff]
    %v929 = vld [vmem:[#allocation20 + $0x40] sm:$0xff]
    %v930 = vld [vmem:[#allocation20 + $0x48] sm:$0xff]
    %v931 = vld [vmem:[#allocation20 + $0x50] sm:$0xff]
    %v932 = vld [vmem:[#allocation20 + $0x58] sm:$0xff]
    %v933 = vld [vmem:[#allocation20 + $0x60] sm:$0xff]
    %v934 = vld [vmem:[#allocation20 + $0x68] sm:$0xff]
    %v935 = vld [vmem:[#allocation20 + $0x70] sm:$0xff]
    %v936 = vld [vmem:[#allocation20 + $0x78] sm:$0xff]
    %v937 = vld [vmem:[%s12] sm:$0x1]
    %v938 = vld [vmem:[%s13] sm:$0x1]
    %939 = vmatpush.msra.mxu0 %v936
    %940 = vmatpush.msra.mxu0 %v935
    %941 = vmatpush.msra.mxu0 %v934
    %942 = vmatpush.msra.mxu0 %v933
    %943 = vmatpush.msra.mxu0 %v932
    %944 = vmatpush.msra.mxu0 %v931
    %945 = vmatpush.msra.mxu0 %v930
    %946 = vmatpush.msra.mxu0 %v929
    %947 = vmatpush.msra.mxu0 %v928
    %948 = vmatpush.msra.mxu0 %v927
    %949 = vmatpush.msra.mxu0 %v926
    %950 = vmatpush.msra.mxu0 %v925
    %951 = vmatpush.msra.mxu0 %v924
    %952 = vmatpush.msra.mxu0 %v923
    %953 = vmatpush.msra.mxu0 %v922
    %954 = vmatpush.msra.mxu0 %v921
    %955 = vmatmul.f32.gmra.mxu0 %v919
    %v956 = vpop.f32.mrf.mxu0
    %v957 = vadd.f32 0.0, %v956
    %958 = vdwg.mxu0
    %v959 = vsub.f32 %v919, %v957
    %v960 = vmul.f32 %v959, %v959
    %961 = vmatpush.msra.mxu0 %v936
    %962 = vmatpush.msra.mxu0 %v935
    %963 = vmatpush.msra.mxu0 %v934
    %964 = vmatpush.msra.mxu0 %v933
    %965 = vmatpush.msra.mxu0 %v932
    %966 = vmatpush.msra.mxu0 %v931
    %967 = vmatpush.msra.mxu0 %v930
    %968 = vmatpush.msra.mxu0 %v929
    %969 = vmatpush.msra.mxu0 %v928
    %970 = vmatpush.msra.mxu0 %v927
    %971 = vmatpush.msra.mxu0 %v926
    %972 = vmatpush.msra.mxu0 %v925
    %973 = vmatpush.msra.mxu0 %v924
    %974 = vmatpush.msra.mxu0 %v923
    %975 = vmatpush.msra.mxu0 %v922
    %976 = vmatpush.msra.mxu0 %v921
    %977 = vmatmul.f32.gmra.mxu0 %v960
    %v978 = vpop.f32.mrf.mxu0
    %v979 = vadd.f32 1e-05, %v978
    %980 = vdwg.mxu0
    %v981 = vrsqrt.pop %v979
    %v982 = vmul.f32 %v981, %v979
    %v983 = vmul.f32 %v982, %v981
    %v984 = vmul.f32 0.5, %v983
    %v985 = vsub.f32 1.5, %v984
    %v986 = vmul.f32 %v981, %v985
    %vm987 = vweird.f32 %v979
    %vm988 = vweird.f32 %v981
    %vm989 = vmor %vm987, %vm988
    %v990 = vsel %vm989, %v981, %v986
    %v991 = vmul.f32 %v959, %v990
    %v993 = vperm.slane %v937, 0
    %v995 = vmul.f32 %v991, %v993
    %v997 = vperm.slane %v938, 0
    %v999 = vadd.f32 %v995, %v997
    %v1000 = vld [vmem:[#allocation14] sm:$0xff]
    %v1001 = vld [vmem:[#allocation14 + $0x8] sm:$0xff]
    %v1002 = vld [vmem:[#allocation14 + $0x10] sm:$0xff]
    %v1003 = vld [vmem:[#allocation14 + $0x18] sm:$0xff]
    %v1004 = vld [vmem:[#allocation14 + $0x20] sm:$0xff]
    %v1005 = vld [vmem:[#allocation14 + $0x28] sm:$0xff]
    %v1006 = vld [vmem:[#allocation14 + $0x30] sm:$0xff]
    %v1007 = vld [vmem:[#allocation14 + $0x38] sm:$0xff]
    %v1008 = vld [vmem:[#allocation14 + $0x40] sm:$0xff]
    %v1009 = vld [vmem:[#allocation14 + $0x48] sm:$0xff]
    %v1010 = vld [vmem:[#allocation14 + $0x50] sm:$0xff]
    %v1011 = vld [vmem:[#allocation14 + $0x58] sm:$0xff]
    %v1012 = vld [vmem:[#allocation14 + $0x60] sm:$0xff]
    %v1013 = vld [vmem:[#allocation14 + $0x68] sm:$0xff]
    %v1014 = vld [vmem:[#allocation14 + $0x70] sm:$0xff]
    %v1015 = vld [vmem:[#allocation14 + $0x78] sm:$0xff]
    %v1016 = vld [vmem:[#allocation14 + $0x80] sm:$0xff]
    %v1017 = vld [vmem:[#allocation14 + $0x88] sm:$0xff]
    %v1018 = vld [vmem:[#allocation14 + $0x90] sm:$0xff]
    %v1019 = vld [vmem:[#allocation14 + $0x98] sm:$0xff]
    %v1020 = vld [vmem:[#allocation14 + $0xa0] sm:$0xff]
    %v1021 = vld [vmem:[#allocation14 + $0xa8] sm:$0xff]
    %v1022 = vld [vmem:[#allocation14 + $0xb0] sm:$0xff]
    %v1023 = vld [vmem:[#allocation14 + $0xb8] sm:$0xff]
    %v1024 = vld [vmem:[#allocation14 + $0xc0] sm:$0xff]
    %v1025 = vld [vmem:[#allocation14 + $0xc8] sm:$0xff]
    %v1026 = vld [vmem:[#allocation14 + $0xd0] sm:$0xff]
    %v1027 = vld [vmem:[#allocation14 + $0xd8] sm:$0xff]
    %v1028 = vld [vmem:[#allocation14 + $0xe0] sm:$0xff]
    %v1029 = vld [vmem:[#allocation14 + $0xe8] sm:$0xff]
    %v1030 = vld [vmem:[#allocation14 + $0xf0] sm:$0xff]
    %v1031 = vld [vmem:[#allocation14 + $0xf8] sm:$0xff]
    %1032 = vmatpush.msra.mxu0 %v1030
    %1033 = vmatpush.msra.mxu0 %v1028
    %1034 = vmatpush.msra.mxu0 %v1026
    %1035 = vmatpush.msra.mxu0 %v1024
    %1036 = vmatpush.msra.mxu0 %v1022
    %1037 = vmatpush.msra.mxu0 %v1020
    %1038 = vmatpush.msra.mxu0 %v1018
    %1039 = vmatpush.msra.mxu0 %v1016
    %1040 = vmatpush.msra.mxu0 %v1014
    %1041 = vmatpush.msra.mxu0 %v1012
    %1042 = vmatpush.msra.mxu0 %v1010
    %1043 = vmatpush.msra.mxu0 %v1008
    %1044 = vmatpush.msra.mxu0 %v1006
    %1045 = vmatpush.msra.mxu0 %v1004
    %1046 = vmatpush.msra.mxu0 %v1002
    %1047 = vmatpush.msra.mxu0 %v1000
    %1048 = vmatmul.f32.gmra.mxu0 %v999
    %v1049 = vpop.f32.mrf.mxu0
    %v1050 = vadd.f32 0.0, %v1049
    %1051 = vdwg.mxu0
    %1052 = vmatpush.msra.mxu0 %v1031
    %1053 = vmatpush.msra.mxu0 %v1029
    %1054 = vmatpush.msra.mxu0 %v1027
    %1055 = vmatpush.msra.mxu0 %v1025
    %1056 = vmatpush.msra.mxu0 %v1023
    %1057 = vmatpush.msra.mxu0 %v1021
    %1058 = vmatpush.msra.mxu0 %v1019
    %1059 = vmatpush.msra.mxu0 %v1017
    %1060 = vmatpush.msra.mxu0 %v1015
    %1061 = vmatpush.msra.mxu0 %v1013
    %1062 = vmatpush.msra.mxu0 %v1011
    %1063 = vmatpush.msra.mxu0 %v1009
    %1064 = vmatpush.msra.mxu0 %v1007
    %1065 = vmatpush.msra.mxu0 %v1005
    %1066 = vmatpush.msra.mxu0 %v1003
    %1067 = vmatpush.msra.mxu0 %v1001
    %1068 = vmatmul.f32.gmra.mxu0 %v999
    %v1069 = vpop.f32.mrf.mxu0
    %v1070 = vadd.f32 0.0, %v1069
    %1071 = vdwg.mxu0
    %v1072 = vadd.f32 %v723, %v1050
    %v1073 = vadd.f32 %v743, %v1070
    %v1074 = vmax.f32 %v1072, 0.0
    %v1075 = vmax.f32 %v1073, 0.0
    %v1076 = vld [vmem:[#allocation16] sm:$0xff]
    %v1077 = vld [vmem:[#allocation16 + $0x8] sm:$0xff]
    %v1078 = vld [vmem:[#allocation16 + $0x10] sm:$0xff]
    %v1079 = vld [vmem:[#allocation16 + $0x18] sm:$0xff]
    %v1080 = vld [vmem:[#allocation16 + $0x20] sm:$0xff]
    %v1081 = vld [vmem:[#allocation16 + $0x28] sm:$0xff]
    %v1082 = vld [vmem:[#allocation16 + $0x30] sm:$0xff]
    %v1083 = vld [vmem:[#allocation16 + $0x38] sm:$0xff]
    %v1084 = vld [vmem:[#allocation16 + $0x40] sm:$0xff]
    %v1085 = vld [vmem:[#allocation16 + $0x48] sm:$0xff]
    %v1086 = vld [vmem:[#allocation16 + $0x50] sm:$0xff]
    %v1087 = vld [vmem:[#allocation16 + $0x58] sm:$0xff]
    %v1088 = vld [vmem:[#allocation16 + $0x60] sm:$0xff]
    %v1089 = vld [vmem:[#allocation16 + $0x68] sm:$0xff]
    %v1090 = vld [vmem:[#allocation16 + $0x70] sm:$0xff]
    %v1091 = vld [vmem:[#allocation16 + $0x78] sm:$0xff]
    %v1092 = vld [vmem:[#allocation16 + $0x80] sm:$0xff]
    %v1093 = vld [vmem:[#allocation16 + $0x88] sm:$0xff]
    %v1094 = vld [vmem:[#allocation16 + $0x90] sm:$0xff]
    %v1095 = vld [vmem:[#allocation16 + $0x98] sm:$0xff]
    %v1096 = vld [vmem:[#allocation16 + $0xa0] sm:$0xff]
    %v1097 = vld [vmem:[#allocation16 + $0xa8] sm:$0xff]
    %v1098 = vld [vmem:[#allocation16 + $0xb0] sm:$0xff]
    %v1099 = vld [vmem:[#allocation16 + $0xb8] sm:$0xff]
    %v1100 = vld [vmem:[#allocation16 + $0xc0] sm:$0xff]
    %v1101 = vld [vmem:[#allocation16 + $0xc8] sm:$0xff]
    %v1102 = vld [vmem:[#allocation16 + $0xd0] sm:$0xff]
    %v1103 = vld [vmem:[#allocation16 + $0xd8] sm:$0xff]
    %v1104 = vld [vmem:[#allocation16 + $0xe0] sm:$0xff]
    %v1105 = vld [vmem:[#allocation16 + $0xe8] sm:$0xff]
    %v1106 = vld [vmem:[#allocation16 + $0xf0] sm:$0xff]
    %v1107 = vld [vmem:[#allocation16 + $0xf8] sm:$0xff]
    %1108 = vmatpush.msra.mxu0 %v1091
    %1109 = vmatpush.msra.mxu0 %v1090
    %1110 = vmatpush.msra.mxu0 %v1089
    %1111 = vmatpush.msra.mxu0 %v1088
    %1112 = vmatpush.msra.mxu0 %v1087
    %1113 = vmatpush.msra.mxu0 %v1086
    %1114 = vmatpush.msra.mxu0 %v1085
    %1115 = vmatpush.msra.mxu0 %v1084
    %1116 = vmatpush.msra.mxu0 %v1083
    %1117 = vmatpush.msra.mxu0 %v1082
    %1118 = vmatpush.msra.mxu0 %v1081
    %1119 = vmatpush.msra.mxu0 %v1080
    %1120 = vmatpush.msra.mxu0 %v1079
    %1121 = vmatpush.msra.mxu0 %v1078
    %1122 = vmatpush.msra.mxu0 %v1077
    %1123 = vmatpush.msra.mxu0 %v1076
    %1124 = vmatmul.f32.gmra.mxu0 %v1074
    %v1125 = vpop.f32.mrf.mxu0
    %v1126 = vadd.f32 0.0, %v1125
    %1127 = vdwg.mxu0
    %1128 = vmatpush.msra.mxu0 %v1107
    %1129 = vmatpush.msra.mxu0 %v1106
    %1130 = vmatpush.msra.mxu0 %v1105
    %1131 = vmatpush.msra.mxu0 %v1104
    %1132 = vmatpush.msra.mxu0 %v1103
    %1133 = vmatpush.msra.mxu0 %v1102
    %1134 = vmatpush.msra.mxu0 %v1101
    %1135 = vmatpush.msra.mxu0 %v1100
    %1136 = vmatpush.msra.mxu0 %v1099
    %1137 = vmatpush.msra.mxu0 %v1098
    %1138 = vmatpush.msra.mxu0 %v1097
    %1139 = vmatpush.msra.mxu0 %v1096
    %1140 = vmatpush.msra.mxu0 %v1095
    %1141 = vmatpush.msra.mxu0 %v1094
    %1142 = vmatpush.msra.mxu0 %v1093
    %1143 = vmatpush.msra.mxu0 %v1092
    %1144 = vmatmul.f32.gmra.mxu0 %v1075
    %v1145 = vpop.f32.mrf.mxu0
    %v1146 = vadd.f32 %v1126, %v1145
    %1147 = vdwg.mxu0
    %v1148 = vld [vmem:[%s14] sm:$0x1]
    %v1149 = vld [vmem:[%s15] sm:$0x1]
    %1150 = vmatpush.msra.mxu0 %v936
    %1151 = vmatpush.msra.mxu0 %v935
    %1152 = vmatpush.msra.mxu0 %v934
    %1153 = vmatpush.msra.mxu0 %v933
    %1154 = vmatpush.msra.mxu0 %v932
    %1155 = vmatpush.msra.mxu0 %v931
    %1156 = vmatpush.msra.mxu0 %v930
    %1157 = vmatpush.msra.mxu0 %v929
    %1158 = vmatpush.msra.mxu0 %v928
    %1159 = vmatpush.msra.mxu0 %v927
    %1160 = vmatpush.msra.mxu0 %v926
    %1161 = vmatpush.msra.mxu0 %v925
    %1162 = vmatpush.msra.mxu0 %v924
    %1163 = vmatpush.msra.mxu0 %v923
    %1164 = vmatpush.msra.mxu0 %v922
    %1165 = vmatpush.msra.mxu0 %v921
    %1166 = vmatmul.f32.gmra.mxu0 %v1146
    %v1167 = vpop.f32.mrf.mxu0
    %v1168 = vadd.f32 0.0, %v1167
    %1169 = vdwg.mxu0
    %v1170 = vsub.f32 %v1146, %v1168
    %v1171 = vmul.f32 %v1170, %v1170
    %1172 = vmatpush.msra.mxu0 %v936
    %1173 = vmatpush.msra.mxu0 %v935
    %1174 = vmatpush.msra.mxu0 %v934
    %1175 = vmatpush.msra.mxu0 %v933
    %1176 = vmatpush.msra.mxu0 %v932
    %1177 = vmatpush.msra.mxu0 %v931
    %1178 = vmatpush.msra.mxu0 %v930
    %1179 = vmatpush.msra.mxu0 %v929
    %1180 = vmatpush.msra.mxu0 %v928
    %1181 = vmatpush.msra.mxu0 %v927
    %1182 = vmatpush.msra.mxu0 %v926
    %1183 = vmatpush.msra.mxu0 %v925
    %1184 = vmatpush.msra.mxu0 %v924
    %1185 = vmatpush.msra.mxu0 %v923
    %1186 = vmatpush.msra.mxu0 %v922
    %1187 = vmatpush.msra.mxu0 %v921
    %1188 = vmatmul.f32.gmra.mxu0 %v1171
    %v1189 = vpop.f32.mrf.mxu0
    %v1190 = vadd.f32 1e-05, %v1189
    %1191 = vdwg.mxu0
    %v1192 = vrsqrt.pop %v1190
    %v1193 = vmul.f32 %v1192, %v1190
    %v1194 = vmul.f32 %v1193, %v1192
    %v1195 = vmul.f32 0.5, %v1194
    %v1196 = vsub.f32 1.5, %v1195
    %v1197 = vmul.f32 %v1192, %v1196
    %vm1198 = vweird.f32 %v1190
    %vm1199 = vweird.f32 %v1192
    %vm1200 = vmor %vm1198, %vm1199
    %v1201 = vsel %vm1200, %v1192, %v1197
    %v1202 = vmul.f32 %v1170, %v1201
    %v1204 = vperm.slane %v1148, 0
    %v1206 = vmul.f32 %v1202, %v1204
    %v1208 = vperm.slane %v1149, 0
    %v1210 = vadd.f32 %v1206, %v1208
    %v1212 = vrot.slane %v1210, 2
    %v1214 = vadd.f32 %v241, %v1210
    %v1215 = vadd.f32 %v242, %v1212
    %1216 = vst [vmem:[#allocation22] sm:$0x3] %v1214
    %1217 = vst [vmem:[#allocation22 + $0x2] sm:$0x3] %v1215
    // Predicated region
    $region114: #{tpu_custom_call.1} parent=1 // pred_check
      _
    $region115: #{tpu_custom_call.1} parent=1 // pred_check_branch
      %1219 = sbr.rel (0) target = $region117
    $region116: #{tpu_custom_call.1} parent=1 // pred_region
      %1221 = vsyncadd [#allocation4], 0
      %s1222 = sshll.u32 [#allocation22], 4
      %s1223 = int_to_ptr.vmem [resolvable:$true] %s1222
      %s1224 = sshll.u32 %s16, 4
      %s1225 = int_to_ptr.hbm [resolvable:$true] %s1224
      %1230 = dma.vmem_to_hbm [thread:$0]  %s1223, 64, %s1225, [#allocation4], 32, 32, 2
    $region117: #{tpu_custom_call.1} parent=1 // pred_fallthru
      _
    // Predicated region
    $region118: #{tpu_custom_call.1} parent=1 // pred_check
      _
    $region119: #{tpu_custom_call.1} parent=1 // pred_check_branch
      %1232 = sbr.rel (0) target = $region121
    $region120: #{tpu_custom_call.1} parent=1 // pred_region
      %1234 = dma.done [#allocation4], 64
    $region121: #{tpu_custom_call.1} parent=1 // pred_fallthru
      _
    %1235 = vsyncpa [#allocation3], 1
    %1236 = vsyncpa [#allocation6], 1
    %1237 = vsyncpa [#allocation9], 1
    %1238 = vsyncpa [#allocation12], 1
    %1239 = vsyncpa [#allocation15], 1
    %1240 = vsyncpa [#allocation18], 1
    %1241 = vsyncpa [#allocation21], 1
    %1242 = vsyncpa [#allocation4], 1

</llo_original>
